<compile_context>
chip_gen: v5e
topology: v5e:2x2
jax: 0.10.0
libtpu: 0.0.40
codegen_flags: <defaults>
</compile_context>

<pallas_src>
import jax
import jax.numpy as jnp
from jax import lax
from jax.experimental import pallas as pl
from jax.experimental.pallas import tpu as pltpu

CONFIG = dict(
    in_channels=4,
    bottleneck_channels=8,
    hidden_channels=8,
    kernel_sizes=(3, 5, 7),
    dropout=0.1,            # eval mode -> identity
    kernel_avg=2,
    output_size=32,
    num_stack_layers=2,
)

NEG = -1e30                 # -inf stand-in for max-pool edge padding (never reaches a matmul)
MXU_DTYPE = jnp.bfloat16    # matmul operand dtype; accumulation stays float32


# ----------------------------------------------------------------------------------
# Fused kernel: BatchNorm + 2 Inception blocks + add + MaxPool1d + stacked LSTM
# ----------------------------------------------------------------------------------
def make_fused_kernel(Bblk, L, C_in, Cb, Ch, kernel_sizes, K, H, NL, U_COLS):
    D = 4 * Ch
    Lp = L // K
    ROWS = Bblk * L
    maxp = max(kernel_sizes) // 2
    shifts = list(range(-maxp, maxp + 1))
    n_in = 9 + 2 * (NL - 1)

    def lstm_cell(gates, c_prev):
        # full 4H-lane activations, then static lane slices; PyTorch gate order i,f,g,o
        sig = jax.nn.sigmoid(gates)
        th = jnp.tanh(gates)
        i_g = sig[:, 0:H]
        f_g = sig[:, H:2 * H]
        g_g = th[:, 2 * H:3 * H]
        o_g = sig[:, 3 * H:4 * H]
        c_new = f_g * c_prev + i_g * g_g
        h_new = o_g * jnp.tanh(c_new)
        return h_new, c_new

    def kernel(*args):
        (x_ref, s0_ref, b0bn_ref, wb_ref, wconv_ref, bnb_ref,
         wih0_ref, whh0_ref, b0_ref) = args[:9]
        layer_refs = args[9:n_in]
        out_ref = args[n_in]
        comb_ref, proj_ref = args[n_in + 1:]

        # ---- per-row time index (int32), built in-kernel: iota, then subtract the
        # ---- largest power-of-two multiples of L (log2(Bblk) exact passes, no div/mod)
        tpos = lax.broadcasted_iota(jnp.int32, (ROWS, 1), 0)
        k = 1
        while k < Bblk:
            k <<= 1
        k >>= 1
        while k >= 1:
            m = k * L
            tpos = jnp.where(tpos >= m, tpos - m, tpos)
            k >>= 1

        def shift_rows(v, s, fill):
            # out[r] = v[r + s] if row r+s lies in the same sample, else `fill`
            if s == 0:
                return v
            rolled = pltpu.roll(v, (-s) % ROWS, axis=0)        # XLU sublane rotate
            if s > 0:
                valid = tpos <= (L - 1 - s)                    # single compare per shift
            else:
                valid = tpos >= (-s)
            return jnp.where(valid, rolled, fill)

        # -------------------- feature stage: (Bblk*L, C) rows --------------------------
        x0 = x_ref[...] * s0_ref[...] + b0bn_ref[...]          # top BatchNorm1d (eval)

        # MaxPool1d(3, stride=1, pad=1) on x0 — shared pool-branch input for both blocks
        pooled = jnp.maximum(jnp.maximum(shift_rows(x0, -1, NEG), x0),
                             shift_rows(x0, 1, NEG))

        # both blocks' 1x1 bottlenecks in one matmul (bf16 operands, f32 accumulation)
        bneck = jnp.dot(x0.astype(MXU_DTYPE), wb_ref[...],
                        preferred_element_type=jnp.float32)    # (ROWS, 2*Cb)

        # one wide LHS: every conv tap is a row shift of bneck, plus the pool branch;
        # zero-padded so the reduction dim lands on a whole 128-lane tile
        parts = [shift_rows(bneck, s, 0.0) for s in shifts]
        parts.append(pooled)
        pad = U_COLS - (len(shifts) * 2 * Cb + C_in)
        if pad:
            parts.append(jnp.zeros((ROWS, pad), jnp.float32))
        U = jnp.concatenate(parts, axis=1)                     # (ROWS, U_COLS)

        # fused conv matmul; BN scale already folded into wconv columns (wrapper)
        feat2 = jnp.dot(U.astype(MXU_DTYPE), wconv_ref[...],
                        preferred_element_type=jnp.float32)    # (ROWS, 2D)
        feat2 = jnp.maximum(feat2 + bnb_ref[...], 0.0)         # BN shift + ReLU
        comb = feat2[:, 0:D] + feat2[:, D:2 * D]               # inception(x0)+inception1(x0)

        # MaxPool1d(kernel_avg): running max via roll in registers, store once,
        # ONE strided read (start is the literal 0 -> already aligned)
        pooled_t = comb
        for j in range(1, K):
            pooled_t = jnp.maximum(pooled_t, pltpu.roll(comb, (-j) % ROWS, axis=0))
        comb_ref[...] = pooled_t
        feats = comb_ref[pl.ds(0, Bblk * Lp, stride=K), :]     # (Bblk*Lp, D)

        # -------------------- stacked LSTM (batch_first, gate order i,f,g,o) -----------
        # layer-0 input projection hoisted out of the serial time loop; stored once so
        # each step's input is a single strided sublane load (rows {b*Lp + t}).
        proj_ref[...] = jnp.dot(feats.astype(MXU_DTYPE), wih0_ref[...],
                                preferred_element_type=jnp.float32) + b0_ref[...]
        whh0 = whh0_ref[...]
        upper = [(layer_refs[2 * i][...], layer_refs[2 * i + 1][...])
                 for i in range(NL - 1)]

        def step(t_idx, hs, cs):
            hs = list(hs)
            cs = list(cs)
            x_t = proj_ref[pl.ds(t_idx, Bblk, stride=Lp), :]   # (Bblk, 4H)
            gates = x_t + jnp.dot(hs[0].astype(MXU_DTYPE), whh0,
                                  preferred_element_type=jnp.float32)
            hs[0], cs[0] = lstm_cell(gates, cs[0])
            for l in range(1, NL):
                wst, bl = upper[l - 1]
                inp = jnp.concatenate([hs[l - 1], hs[l]], axis=1)          # (Bblk, 2H)
                gates = jnp.dot(inp.astype(MXU_DTYPE), wst,
                                preferred_element_type=jnp.float32) + bl
                hs[l], cs[l] = lstm_cell(gates, cs[l])
            return hs, cs

        hs = [jnp.zeros((Bblk, H), jnp.float32) for _ in range(NL)]
        cs = [jnp.zeros((Bblk, H), jnp.float32) for _ in range(NL)]
        if Lp <= 16:
            # short fixed trip count: static unroll (all slice starts are static)
            for t in range(Lp):
                hs, cs = step(t, hs, cs)
        else:
            # long sequences: bounded live ranges via fori_loop with a modest unroll
            def body(t, carry):
                nh, nc = step(t, carry[0], carry[1])
                return (tuple(nh), tuple(nc))
            hs, cs = lax.fori_loop(0, Lp, body, (tuple(hs), tuple(cs)), unroll=4)

        out_ref[...] = hs[NL - 1]                              # lstm_out[:, -1, :]

    return kernel


# ----------------------------------------------------------------------------------
# Wrapper: fold per-branch conv weights (and BN scale) into one wide RHS, call kernel
# ----------------------------------------------------------------------------------
def _build_conv_rhs(pA, pB, C_in, Cb, Ch, kernel_sizes, maxp, u_cols):
    D = 4 * Ch
    n_shift = 2 * maxp + 1
    used = n_shift * 2 * Cb + C_in
    W = jnp.zeros((u_cols, 2 * D), jnp.float32)                # rows beyond `used` stay 0
    for bi, p in enumerate((pA, pB)):
        col0 = bi * D
        for ki, k in enumerate(kernel_sizes):
            pd = k // 2
            Wk = p['Wks'][ki]                                  # (k, Cb, Ch)
            for j in range(k):
                si = (j - pd) + maxp
                r0 = si * 2 * Cb + bi * Cb
                W = W.at[r0:r0 + Cb, col0 + ki * Ch:col0 + (ki + 1) * Ch].set(Wk[j])
        W = W.at[used - C_in:used, col0 + 3 * Ch:col0 + 4 * Ch].set(p['Wp'])
    return W


def causal_rnn_forward(x, params, config):
    B, L, C_in = x.shape
    Cb = config['bottleneck_channels']
    Ch = config['hidden_channels']
    ksz = tuple(config['kernel_sizes'])
    K = config['kernel_avg']
    H = config['output_size']
    NL = config['num_stack_layers']
    D = 4 * Ch
    # TODO(synk): PyTorch MaxPool1d silently drops a ragged tail window; not implemented.
    assert L % K == 0
    Lp = L // K
    maxp = max(ksz) // 2
    n_shift = 2 * maxp + 1
    U_COLS = ((n_shift * 2 * Cb + C_in + 127) // 128) * 128    # pad reduction dim to 128

    # ---- batch block: bounds per-block VMEM (~8 KB per lane-padded row of
    # ---- intermediates) and lets v7x shard independent samples across TensorCores.
    Bblk = B
    if B > 8 and B % 8 == 0:
        Bblk = 8
        for cand in (64, 32, 16, 8):                           # prefer >=512 rows / block
            if B % cand == 0 and cand * L * 8192 <= (12 << 20):
                Bblk = cand
                break
    grid = (B // Bblk,)

    # fused / folded weights (pure one-time layout work outside the kernel)
    bns_ab = jnp.concatenate([params['A']['bns'], params['B']['bns']], axis=1)   # (1, 2D)
    bnb_ab = jnp.concatenate([params['A']['bnb'], params['B']['bnb']], axis=1)   # (1, 2D)
    wb_ab = jnp.concatenate([params['A']['Wb'], params['B']['Wb']], axis=1)      # (C_in, 2Cb)
    wconv = _build_conv_rhs(params['A'], params['B'], C_in, Cb, Ch, ksz, maxp, U_COLS)
    wconv = wconv * bns_ab                                     # fold BN scale into the matmul

    args = [
        x.reshape(B * L, C_in),
        params['scale0'], params['shift0'],
        wb_ab.astype(MXU_DTYPE), wconv.astype(MXU_DTYPE), bnb_ab,
        params['lstm'][0]['Wih'].astype(MXU_DTYPE),
        params['lstm'][0]['Whh'].astype(MXU_DTYPE),
        params['lstm'][0]['b'],
    ]
    in_specs = [
        pl.BlockSpec((Bblk * L, C_in), lambda i: (i, 0)),
        pl.BlockSpec((1, C_in), lambda i: (0, 0)),
        pl.BlockSpec((1, C_in), lambda i: (0, 0)),
        pl.BlockSpec((C_in, 2 * Cb), lambda i: (0, 0)),
        pl.BlockSpec((U_COLS, 2 * D), lambda i: (0, 0)),
        pl.BlockSpec((1, 2 * D), lambda i: (0, 0)),
        pl.BlockSpec((D, 4 * H), lambda i: (0, 0)),
        pl.BlockSpec((H, 4 * H), lambda i: (0, 0)),
        pl.BlockSpec((1, 4 * H), lambda i: (0, 0)),
    ]
    for l in range(1, NL):
        args.append(jnp.concatenate([params['lstm'][l]['Wih'],
                                     params['lstm'][l]['Whh']], axis=0).astype(MXU_DTYPE))
        args.append(params['lstm'][l]['b'])
        in_specs.append(pl.BlockSpec((2 * H, 4 * H), lambda i: (0, 0)))
        in_specs.append(pl.BlockSpec((1, 4 * H), lambda i: (0, 0)))

    # per-block VMEM budget: ~14 lane-padded (rows,128) f32 slabs + weights + headroom
    rows = Bblk * L
    vmem_bytes = int(min(max(rows * 128 * 4 * 14 + (2 << 20), 16 << 20), 64 << 20))

    kernel = make_fused_kernel(Bblk, L, C_in, Cb, Ch, ksz, K, H, NL, U_COLS)
    out = pl.pallas_call(
        kernel,
        out_shape=jax.ShapeDtypeStruct((B, H), jnp.float32),
        grid=grid,
        in_specs=in_specs,
        out_specs=pl.BlockSpec((Bblk, H), lambda i: (i, 0)),
        scratch_shapes=[pltpu.VMEM((Bblk * L, D), jnp.float32),
                        pltpu.VMEM((Bblk * Lp, 4 * H), jnp.float32)],
        compiler_params=pltpu.CompilerParams(
            dimension_semantics=("parallel",),
            vmem_limit_bytes=vmem_bytes),
    )(*args)
    return out


# ----------------------------------------------------------------------------------
# Deterministic parameter init (synthetic; kaiming/orthogonal stand-ins are scaled normals)
# ----------------------------------------------------------------------------------
def init_params(key, config):
    C_in = config['in_channels']
    Cb = config['bottleneck_channels']
    Ch = config['hidden_channels']
    ksz = tuple(config['kernel_sizes'])
    H = config['output_size']
    NL = config['num_stack_layers']
    D = 4 * Ch
    eps = 1e-5

    keys = iter(jax.random.split(key, 64))

    def nrm(shape, std=0.3):
        return (std * jax.random.normal(next(keys), shape)).astype(jnp.float32)

    # top BatchNorm1d(in_channels): eval mode, running_mean=0, running_var=1
    gamma0, beta0 = nrm((1, C_in)), nrm((1, C_in))
    scale0 = gamma0 / jnp.sqrt(1.0 + eps)
    shift0 = beta0

    def inception_params():
        gamma, beta = nrm((1, D)), nrm((1, D))
        return dict(
            Wb=nrm((C_in, Cb)),
            Wks=[nrm((k, Cb, Ch)) for k in ksz],
            Wp=nrm((C_in, Ch)),
            bns=gamma / jnp.sqrt(1.0 + eps),
            bnb=beta,
        )

    lstm = []
    d_in = D
    for _ in range(NL):
        lstm.append(dict(
            Wih=nrm((d_in, 4 * H), std=0.2),
            Whh=nrm((H, 4 * H), std=0.2),
            b=jnp.zeros((1, 4 * H), jnp.float32),   # LSTM biases = 0 per init_weights
        ))
        d_in = H

    return dict(scale0=scale0, shift0=shift0,
                A=inception_params(), B=inception_params(), lstm=lstm)


# ----------------------------------------------------------------------------------
# Pure-JAX float32 reference (true module semantics) for a correctness check
# ----------------------------------------------------------------------------------
def ref_forward(x, params, config):
    B, L, _ = x.shape
    K = config['kernel_avg']
    H = config['output_size']
    NL = config['num_stack_layers']
    x0 = x * params['scale0'] + params['shift0']

    def inception(p):
        bneck = jnp.einsum('blc,cd->bld', x0, p['Wb'])
        outs = []
        for W in p['Wks']:
            k = W.shape[0]
            pd = k // 2
            padded = jnp.pad(bneck, ((0, 0), (pd, pd), (0, 0)))
            acc = sum(jnp.einsum('blc,cd->bld', padded[:, j:j + L, :], W[j]) for j in range(k))
            outs.append(acc)
        padx = jnp.pad(x0, ((0, 0), (1, 1), (0, 0)), constant_values=-1e30)
        pooled = jnp.maximum(jnp.maximum(padx[:, 0:L], padx[:, 1:1 + L]), padx[:, 2:2 + L])
        outs.append(jnp.einsum('blc,cd->bld', pooled, p['Wp']))
        feat = jnp.concatenate(outs, axis=-1) * p['bns'] + p['bnb']
        return jnp.maximum(feat, 0.0)

    f = inception(params['A']) + inception(params['B'])
    Lp = L // K
    f = f[:, :Lp * K].reshape(B, Lp, K, -1).max(axis=2)

    h = jnp.zeros((NL, B, H))
    c = jnp.zeros((NL, B, H))
    for t in range(Lp):
        inp = f[:, t]
        for l in range(NL):
            p = params['lstm'][l]
            gates = inp @ p['Wih'] + h[l] @ p['Whh'] + p['b']
            i_g = jax.nn.sigmoid(gates[:, :H])
            f_g = jax.nn.sigmoid(gates[:, H:2 * H])
            g_g = jnp.tanh(gates[:, 2 * H:3 * H])
            o_g = jax.nn.sigmoid(gates[:, 3 * H:])
            cn = f_g * c[l] + i_g * g_g
            hn = o_g * jnp.tanh(cn)
            h = h.at[l].set(hn)
            c = c.at[l].set(cn)
            inp = hn
    return h[-1]


if __name__ == "__main__":
    config = CONFIG
    key = jax.random.PRNGKey(0)
    kx, kp = jax.random.split(key)

    B, L = 2, 16
    x = jax.random.normal(kx, (B, L, config['in_channels']), jnp.float32)
    params = init_params(kp, config)

    out = jax.block_until_ready(causal_rnn_forward(x, params, config))
    ref = ref_forward(x, params, config)

    assert out.shape == (B, config['output_size'])
    max_err = float(jnp.max(jnp.abs(out - ref)))
    # bf16 MXU operands (f32 accumulation) drift slightly from the pure-f32 reference
    # through the recurrence (~1e-2); structural bugs produce O(0.1-1) errors.
    assert max_err < 5e-2, f"mismatch, max abs diff = {max_err}"
    print("KERNEL_OK")
</pallas_src>

<mosaic_0001>
module attributes {stable_mosaic.version = 11 : i64} {
  func.func @kernel(%arg0: i32, %arg1: memref<32x4xf32, #tpu.memory_space<vmem>>, %arg2: memref<1x4xf32, #tpu.memory_space<vmem>>, %arg3: memref<1x4xf32, #tpu.memory_space<vmem>>, %arg4: memref<4x16xbf16, #tpu.memory_space<vmem>>, %arg5: memref<128x64xbf16, #tpu.memory_space<vmem>>, %arg6: memref<1x64xf32, #tpu.memory_space<vmem>>, %arg7: memref<32x128xbf16, #tpu.memory_space<vmem>>, %arg8: memref<32x128xbf16, #tpu.memory_space<vmem>>, %arg9: memref<1x128xf32, #tpu.memory_space<vmem>>, %arg10: memref<64x128xbf16, #tpu.memory_space<vmem>>, %arg11: memref<1x128xf32, #tpu.memory_space<vmem>>, %arg12: memref<2x32xf32, #tpu.memory_space<vmem>>, %arg13: memref<32x32xf32, #tpu.memory_space<vmem>>, %arg14: memref<16x128xf32, #tpu.memory_space<vmem>>) attributes {dimension_semantics = [#tpu.dimension_semantics<parallel>], iteration_bounds = array<i64: 1>, scalar_prefetch = 0 : i64, scratch_operands = 2 : i64, tpu.core_type = #tpu.core_type<tc>, window_params = [{transform_indices = @transform_0, window_bounds = array<i64: 32, 4>}, {pipeline_mode = #tpu.pipeline_mode<synchronous>, transform_indices = @transform_1, window_bounds = array<i64: 1, 4>}, {pipeline_mode = #tpu.pipeline_mode<synchronous>, transform_indices = @transform_2, window_bounds = array<i64: 1, 4>}, {pipeline_mode = #tpu.pipeline_mode<synchronous>, transform_indices = @transform_3, window_bounds = array<i64: 4, 16>}, {pipeline_mode = #tpu.pipeline_mode<synchronous>, transform_indices = @transform_4, window_bounds = array<i64: 128, 64>}, {pipeline_mode = #tpu.pipeline_mode<synchronous>, transform_indices = @transform_5, window_bounds = array<i64: 1, 64>}, {pipeline_mode = #tpu.pipeline_mode<synchronous>, transform_indices = @transform_6, window_bounds = array<i64: 32, 128>}, {pipeline_mode = #tpu.pipeline_mode<synchronous>, transform_indices = @transform_7, window_bounds = array<i64: 32, 128>}, {pipeline_mode = #tpu.pipeline_mode<synchronous>, transform_indices = @transform_8, window_bounds = array<i64: 1, 128>}, {pipeline_mode = #tpu.pipeline_mode<synchronous>, transform_indices = @transform_9, window_bounds = array<i64: 64, 128>}, {pipeline_mode = #tpu.pipeline_mode<synchronous>, transform_indices = @transform_10, window_bounds = array<i64: 1, 128>}, {transform_indices = @transform_11, window_bounds = array<i64: 2, 32>}]} {
    %0 = tpu.iota {dimensions = array<i32: 0>} : vector<32x1xi32>
    %c16_i32 = arith.constant 16 : i32
    %1 = vector.broadcast %c16_i32 : i32 to vector<32x1xi32>
    %2 = arith.cmpi sge, %0, %1 : vector<32x1xi32>
    %c16_i32_0 = arith.constant 16 : i32
    %3 = vector.broadcast %c16_i32_0 : i32 to vector<32x1xi32>
    %4 = arith.subi %0, %3 : vector<32x1xi32>
    %5 = arith.select %2, %4, %0 : vector<32x1xi1>, vector<32x1xi32>
    %c0 = arith.constant 0 : index
    %c0_1 = arith.constant 0 : index
    %6 = vector.load %arg1[%c0, %c0_1] : memref<32x4xf32, #tpu.memory_space<vmem>>, vector<32x4xf32>
    %c0_2 = arith.constant 0 : index
    %c0_3 = arith.constant 0 : index
    %7 = vector.load %arg2[%c0_2, %c0_3] : memref<1x4xf32, #tpu.memory_space<vmem>>, vector<1x4xf32>
    %8 = vector.broadcast %7 : vector<1x4xf32> to vector<32x4xf32>
    %9 = arith.mulf %6, %8 : vector<32x4xf32>
    %c0_4 = arith.constant 0 : index
    %c0_5 = arith.constant 0 : index
    %10 = vector.load %arg3[%c0_4, %c0_5] : memref<1x4xf32, #tpu.memory_space<vmem>>, vector<1x4xf32>
    %11 = vector.broadcast %10 : vector<1x4xf32> to vector<32x4xf32>
    %12 = arith.addf %9, %11 : vector<32x4xf32>
    %c1_i32 = arith.constant 1 : i32
    %13 = tpu.dynamic_rotate %12 by %c1_i32 dim 0 : vector<32x4xf32>, i32 -> vector<32x4xf32>
    %c1_i32_6 = arith.constant 1 : i32
    %14 = vector.broadcast %c1_i32_6 : i32 to vector<32x1xi32>
    %15 = arith.cmpi sge, %5, %14 : vector<32x1xi32>
    %cst = arith.constant -1.000000e+30 : f32
    %16 = vector.shape_cast %15 : vector<32x1xi1> to vector<32x1xi1>
    %17 = vector.broadcast %16 : vector<32x1xi1> to vector<32x4xi1>
    %18 = vector.broadcast %cst : f32 to vector<32x4xf32>
    %19 = arith.select %17, %13, %18 : vector<32x4xi1>, vector<32x4xf32>
    %20 = arith.maximumf %19, %12 : vector<32x4xf32>
    %c31_i32 = arith.constant 31 : i32
    %21 = tpu.dynamic_rotate %12 by %c31_i32 dim 0 : vector<32x4xf32>, i32 -> vector<32x4xf32>
    %c14_i32 = arith.constant 14 : i32
    %22 = vector.broadcast %c14_i32 : i32 to vector<32x1xi32>
    %23 = arith.cmpi sle, %5, %22 : vector<32x1xi32>
    %cst_7 = arith.constant -1.000000e+30 : f32
    %24 = vector.shape_cast %23 : vector<32x1xi1> to vector<32x1xi1>
    %25 = vector.broadcast %24 : vector<32x1xi1> to vector<32x4xi1>
    %26 = vector.broadcast %cst_7 : f32 to vector<32x4xf32>
    %27 = arith.select %25, %21, %26 : vector<32x4xi1>, vector<32x4xf32>
    %28 = arith.maximumf %20, %27 : vector<32x4xf32>
    %29 = arith.truncf %12 : vector<32x4xf32> to vector<32x4xbf16>
    %c0_8 = arith.constant 0 : index
    %c0_9 = arith.constant 0 : index
    %30 = vector.load %arg4[%c0_8, %c0_9] : memref<4x16xbf16, #tpu.memory_space<vmem>>, vector<4x16xbf16>
    %cst_10 = arith.constant dense<0.000000e+00> : vector<32x16xf32>
    %31 = tpu.matmul %29, %30, %cst_10 {dimension_numbers = #tpu.dot_dimension_numbers<[1], [0], [0], [1], [0, 0, 1, 1], [], []>} : vector<32x4xbf16>, vector<4x16xbf16>, vector<32x16xf32> -> vector<32x16xf32>
    %c3_i32 = arith.constant 3 : i32
    %32 = tpu.dynamic_rotate %31 by %c3_i32 dim 0 : vector<32x16xf32>, i32 -> vector<32x16xf32>
    %c3_i32_11 = arith.constant 3 : i32
    %33 = vector.broadcast %c3_i32_11 : i32 to vector<32x1xi32>
    %34 = arith.cmpi sge, %5, %33 : vector<32x1xi32>
    %cst_12 = arith.constant 0.000000e+00 : f32
    %35 = vector.shape_cast %34 : vector<32x1xi1> to vector<32x1xi1>
    %36 = vector.broadcast %35 : vector<32x1xi1> to vector<32x16xi1>
    %37 = vector.broadcast %cst_12 : f32 to vector<32x16xf32>
    %38 = arith.select %36, %32, %37 : vector<32x16xi1>, vector<32x16xf32>
    %c2_i32 = arith.constant 2 : i32
    %39 = tpu.dynamic_rotate %31 by %c2_i32 dim 0 : vector<32x16xf32>, i32 -> vector<32x16xf32>
    %c2_i32_13 = arith.constant 2 : i32
    %40 = vector.broadcast %c2_i32_13 : i32 to vector<32x1xi32>
    %41 = arith.cmpi sge, %5, %40 : vector<32x1xi32>
    %cst_14 = arith.constant 0.000000e+00 : f32
    %42 = vector.shape_cast %41 : vector<32x1xi1> to vector<32x1xi1>
    %43 = vector.broadcast %42 : vector<32x1xi1> to vector<32x16xi1>
    %44 = vector.broadcast %cst_14 : f32 to vector<32x16xf32>
    %45 = arith.select %43, %39, %44 : vector<32x16xi1>, vector<32x16xf32>
    %c1_i32_15 = arith.constant 1 : i32
    %46 = tpu.dynamic_rotate %31 by %c1_i32_15 dim 0 : vector<32x16xf32>, i32 -> vector<32x16xf32>
    %c1_i32_16 = arith.constant 1 : i32
    %47 = vector.broadcast %c1_i32_16 : i32 to vector<32x1xi32>
    %48 = arith.cmpi sge, %5, %47 : vector<32x1xi32>
    %cst_17 = arith.constant 0.000000e+00 : f32
    %49 = vector.shape_cast %48 : vector<32x1xi1> to vector<32x1xi1>
    %50 = vector.broadcast %49 : vector<32x1xi1> to vector<32x16xi1>
    %51 = vector.broadcast %cst_17 : f32 to vector<32x16xf32>
    %52 = arith.select %50, %46, %51 : vector<32x16xi1>, vector<32x16xf32>
    %c31_i32_18 = arith.constant 31 : i32
    %53 = tpu.dynamic_rotate %31 by %c31_i32_18 dim 0 : vector<32x16xf32>, i32 -> vector<32x16xf32>
    %c14_i32_19 = arith.constant 14 : i32
    %54 = vector.broadcast %c14_i32_19 : i32 to vector<32x1xi32>
    %55 = arith.cmpi sle, %5, %54 : vector<32x1xi32>
    %cst_20 = arith.constant 0.000000e+00 : f32
    %56 = vector.shape_cast %55 : vector<32x1xi1> to vector<32x1xi1>
    %57 = vector.broadcast %56 : vector<32x1xi1> to vector<32x16xi1>
    %58 = vector.broadcast %cst_20 : f32 to vector<32x16xf32>
    %59 = arith.select %57, %53, %58 : vector<32x16xi1>, vector<32x16xf32>
    %c30_i32 = arith.constant 30 : i32
    %60 = tpu.dynamic_rotate %31 by %c30_i32 dim 0 : vector<32x16xf32>, i32 -> vector<32x16xf32>
    %c13_i32 = arith.constant 13 : i32
    %61 = vector.broadcast %c13_i32 : i32 to vector<32x1xi32>
    %62 = arith.cmpi sle, %5, %61 : vector<32x1xi32>
    %cst_21 = arith.constant 0.000000e+00 : f32
    %63 = vector.shape_cast %62 : vector<32x1xi1> to vector<32x1xi1>
    %64 = vector.broadcast %63 : vector<32x1xi1> to vector<32x16xi1>
    %65 = vector.broadcast %cst_21 : f32 to vector<32x16xf32>
    %66 = arith.select %64, %60, %65 : vector<32x16xi1>, vector<32x16xf32>
    %c29_i32 = arith.constant 29 : i32
    %67 = tpu.dynamic_rotate %31 by %c29_i32 dim 0 : vector<32x16xf32>, i32 -> vector<32x16xf32>
    %c12_i32 = arith.constant 12 : i32
    %68 = vector.broadcast %c12_i32 : i32 to vector<32x1xi32>
    %69 = arith.cmpi sle, %5, %68 : vector<32x1xi32>
    %cst_22 = arith.constant 0.000000e+00 : f32
    %70 = vector.shape_cast %69 : vector<32x1xi1> to vector<32x1xi1>
    %71 = vector.broadcast %70 : vector<32x1xi1> to vector<32x16xi1>
    %72 = vector.broadcast %cst_22 : f32 to vector<32x16xf32>
    %73 = arith.select %71, %67, %72 : vector<32x16xi1>, vector<32x16xf32>
    %cst_23 = arith.constant 0.000000e+00 : f32
    %74 = vector.broadcast %cst_23 : f32 to vector<32x12xf32>
    %75 = tpu.concatenate %38, %45, %52, %31, %59, %66, %73, %28, %74 in 1 : vector<32x16xf32>, vector<32x16xf32>, vector<32x16xf32>, vector<32x16xf32>, vector<32x16xf32>, vector<32x16xf32>, vector<32x16xf32>, vector<32x4xf32>, vector<32x12xf32> -> vector<32x128xf32>
    %76 = arith.truncf %75 : vector<32x128xf32> to vector<32x128xbf16>
    %c0_24 = arith.constant 0 : index
    %c0_25 = arith.constant 0 : index
    %77 = vector.load %arg5[%c0_24, %c0_25] : memref<128x64xbf16, #tpu.memory_space<vmem>>, vector<128x64xbf16>
    %cst_26 = arith.constant dense<0.000000e+00> : vector<32x64xf32>
    %78 = tpu.matmul %76, %77, %cst_26 {dimension_numbers = #tpu.dot_dimension_numbers<[1], [0], [0], [1], [0, 0, 1, 1], [], []>} : vector<32x128xbf16>, vector<128x64xbf16>, vector<32x64xf32> -> vector<32x64xf32>
    %c0_27 = arith.constant 0 : index
    %c0_28 = arith.constant 0 : index
    %79 = vector.load %arg6[%c0_27, %c0_28] : memref<1x64xf32, #tpu.memory_space<vmem>>, vector<1x64xf32>
    %80 = vector.broadcast %79 : vector<1x64xf32> to vector<32x64xf32>
    %81 = arith.addf %78, %80 : vector<32x64xf32>
    %cst_29 = arith.constant 0.000000e+00 : f32
    %82 = vector.broadcast %cst_29 : f32 to vector<32x64xf32>
    %83 = arith.maximumf %81, %82 : vector<32x64xf32>
    %84 = vector.extract_strided_slice %83 {offsets = [0, 0], sizes = [32, 32], strides = [1, 1]} : vector<32x64xf32> to vector<32x32xf32>
    %85 = vector.extract_strided_slice %83 {offsets = [0, 32], sizes = [32, 32], strides = [1, 1]} : vector<32x64xf32> to vector<32x32xf32>
    %86 = arith.addf %84, %85 : vector<32x32xf32>
    %c31_i32_30 = arith.constant 31 : i32
    %87 = tpu.dynamic_rotate %86 by %c31_i32_30 dim 0 : vector<32x32xf32>, i32 -> vector<32x32xf32>
    %88 = arith.maximumf %86, %87 : vector<32x32xf32>
    %c0_31 = arith.constant 0 : index
    %c0_32 = arith.constant 0 : index
    %89 = vector.load %arg13[%c0_31, %c0_32] : memref<32x32xf32, #tpu.memory_space<vmem>>, vector<32x32xf32>
    tpu.vector_store %arg13[%c0_31, %c0_32], %88 {strides = array<i32>} : memref<32x32xf32, #tpu.memory_space<vmem>>, vector<32x32xf32>,
    %c0_33 = arith.constant 0 : index
    %c0_34 = arith.constant 0 : index
    %90 = tpu.strided_load %arg13[%c0_33, %c0_34] {strides = array<i32: 2, 1>} : memref<32x32xf32, #tpu.memory_space<vmem>>, vector<16x32xf32>
    %91 = arith.truncf %90 : vector<16x32xf32> to vector<16x32xbf16>
    %c0_35 = arith.constant 0 : index
    %c0_36 = arith.constant 0 : index
    %92 = vector.load %arg7[%c0_35, %c0_36] : memref<32x128xbf16, #tpu.memory_space<vmem>>, vector<32x128xbf16>
    %cst_37 = arith.constant dense<0.000000e+00> : vector<16x128xf32>
    %93 = tpu.matmul %91, %92, %cst_37 {dimension_numbers = #tpu.dot_dimension_numbers<[1], [0], [0], [1], [0, 0, 1, 1], [], []>} : vector<16x32xbf16>, vector<32x128xbf16>, vector<16x128xf32> -> vector<16x128xf32>
    %c0_38 = arith.constant 0 : index
    %c0_39 = arith.constant 0 : index
    %94 = vector.load %arg9[%c0_38, %c0_39] : memref<1x128xf32, #tpu.memory_space<vmem>>, vector<1x128xf32>
    %95 = vector.broadcast %94 : vector<1x128xf32> to vector<16x128xf32>
    %96 = arith.addf %93, %95 : vector<16x128xf32>
    %c0_40 = arith.constant 0 : index
    %c0_41 = arith.constant 0 : index
    %97 = vector.load %arg14[%c0_40, %c0_41] : memref<16x128xf32, #tpu.memory_space<vmem>>, vector<16x128xf32>
    tpu.vector_store %arg14[%c0_40, %c0_41], %96 {strides = array<i32>} : memref<16x128xf32, #tpu.memory_space<vmem>>, vector<16x128xf32>,
    %c0_42 = arith.constant 0 : index
    %c0_43 = arith.constant 0 : index
    %98 = vector.load %arg8[%c0_42, %c0_43] : memref<32x128xbf16, #tpu.memory_space<vmem>>, vector<32x128xbf16>
    %c0_44 = arith.constant 0 : index
    %c0_45 = arith.constant 0 : index
    %99 = vector.load %arg10[%c0_44, %c0_45] : memref<64x128xbf16, #tpu.memory_space<vmem>>, vector<64x128xbf16>
    %c0_46 = arith.constant 0 : index
    %c0_47 = arith.constant 0 : index
    %100 = vector.load %arg11[%c0_46, %c0_47] : memref<1x128xf32, #tpu.memory_space<vmem>>, vector<1x128xf32>
    %cst_48 = arith.constant 0.000000e+00 : f32
    %101 = vector.broadcast %cst_48 : f32 to vector<2x32xf32>
    %cst_49 = arith.constant 0.000000e+00 : f32
    %102 = vector.broadcast %cst_49 : f32 to vector<2x32xf32>
    %cst_50 = arith.constant 0.000000e+00 : f32
    %103 = vector.broadcast %cst_50 : f32 to vector<2x32xf32>
    %cst_51 = arith.constant 0.000000e+00 : f32
    %104 = vector.broadcast %cst_51 : f32 to vector<2x32xf32>
    %c0_52 = arith.constant 0 : index
    %c0_53 = arith.constant 0 : index
    %105 = tpu.strided_load %arg14[%c0_52, %c0_53] {strides = array<i32: 8, 1>} : memref<16x128xf32, #tpu.memory_space<vmem>>, vector<2x128xf32>
    %106 = arith.truncf %101 : vector<2x32xf32> to vector<2x32xbf16>
    %cst_54 = arith.constant dense<0.000000e+00> : vector<2x128xf32>
    %107 = tpu.matmul %106, %98, %cst_54 {dimension_numbers = #tpu.dot_dimension_numbers<[1], [0], [0], [1], [0, 0, 1, 1], [], []>} : vector<2x32xbf16>, vector<32x128xbf16>, vector<2x128xf32> -> vector<2x128xf32>
    %108 = arith.addf %105, %107 : vector<2x128xf32>
    %109 = arith.negf %108 : vector<2x128xf32>
    %110 = math.exp %109 : vector<2x128xf32>
    %cst_55 = arith.constant 1.000000e+00 : f32
    %111 = vector.broadcast %cst_55 : f32 to vector<2x128xf32>
    %112 = arith.addf %111, %110 : vector<2x128xf32>
    %113 = arith.divf %111, %112 : vector<2x128xf32>
    %114 = math.tanh %108 : vector<2x128xf32>
    %115 = vector.extract_strided_slice %113 {offsets = [0, 0], sizes = [2, 32], strides = [1, 1]} : vector<2x128xf32> to vector<2x32xf32>
    %116 = vector.extract_strided_slice %113 {offsets = [0, 32], sizes = [2, 32], strides = [1, 1]} : vector<2x128xf32> to vector<2x32xf32>
    %117 = vector.extract_strided_slice %114 {offsets = [0, 64], sizes = [2, 32], strides = [1, 1]} : vector<2x128xf32> to vector<2x32xf32>
    %118 = vector.extract_strided_slice %113 {offsets = [0, 96], sizes = [2, 32], strides = [1, 1]} : vector<2x128xf32> to vector<2x32xf32>
    %119 = arith.mulf %116, %103 : vector<2x32xf32>
    %120 = arith.mulf %115, %117 : vector<2x32xf32>
    %121 = arith.addf %119, %120 : vector<2x32xf32>
    %122 = math.tanh %121 : vector<2x32xf32>
    %123 = arith.mulf %118, %122 : vector<2x32xf32>
    %124 = tpu.concatenate %123, %102 in 1 : vector<2x32xf32>, vector<2x32xf32> -> vector<2x64xf32>
    %125 = arith.truncf %124 : vector<2x64xf32> to vector<2x64xbf16>
    %cst_56 = arith.constant dense<0.000000e+00> : vector<2x128xf32>
    %126 = tpu.matmul %125, %99, %cst_56 {dimension_numbers = #tpu.dot_dimension_numbers<[1], [0], [0], [1], [0, 0, 1, 1], [], []>} : vector<2x64xbf16>, vector<64x128xbf16>, vector<2x128xf32> -> vector<2x128xf32>
    %127 = vector.broadcast %100 : vector<1x128xf32> to vector<2x128xf32>
    %128 = arith.addf %126, %127 : vector<2x128xf32>
    %129 = arith.negf %128 : vector<2x128xf32>
    %130 = math.exp %129 : vector<2x128xf32>
    %cst_57 = arith.constant 1.000000e+00 : f32
    %131 = vector.broadcast %cst_57 : f32 to vector<2x128xf32>
    %132 = arith.addf %131, %130 : vector<2x128xf32>
    %133 = arith.divf %131, %132 : vector<2x128xf32>
    %134 = math.tanh %128 : vector<2x128xf32>
    %135 = vector.extract_strided_slice %133 {offsets = [0, 0], sizes = [2, 32], strides = [1, 1]} : vector<2x128xf32> to vector<2x32xf32>
    %136 = vector.extract_strided_slice %133 {offsets = [0, 32], sizes = [2, 32], strides = [1, 1]} : vector<2x128xf32> to vector<2x32xf32>
    %137 = vector.extract_strided_slice %134 {offsets = [0, 64], sizes = [2, 32], strides = [1, 1]} : vector<2x128xf32> to vector<2x32xf32>
    %138 = vector.extract_strided_slice %133 {offsets = [0, 96], sizes = [2, 32], strides = [1, 1]} : vector<2x128xf32> to vector<2x32xf32>
    %139 = arith.mulf %136, %104 : vector<2x32xf32>
    %140 = arith.mulf %135, %137 : vector<2x32xf32>
    %141 = arith.addf %139, %140 : vector<2x32xf32>
    %142 = math.tanh %141 : vector<2x32xf32>
    %143 = arith.mulf %138, %142 : vector<2x32xf32>
    %c1 = arith.constant 1 : index
    %c0_58 = arith.constant 0 : index
    %144 = tpu.strided_load %arg14[%c1, %c0_58] {strides = array<i32: 8, 1>} : memref<16x128xf32, #tpu.memory_space<vmem>>, vector<2x128xf32>
    %145 = arith.truncf %123 : vector<2x32xf32> to vector<2x32xbf16>
    %cst_59 = arith.constant dense<0.000000e+00> : vector<2x128xf32>
    %146 = tpu.matmul %145, %98, %cst_59 {dimension_numbers = #tpu.dot_dimension_numbers<[1], [0], [0], [1], [0, 0, 1, 1], [], []>} : vector<2x32xbf16>, vector<32x128xbf16>, vector<2x128xf32> -> vector<2x128xf32>
    %147 = arith.addf %144, %146 : vector<2x128xf32>
    %148 = arith.negf %147 : vector<2x128xf32>
    %149 = math.exp %148 : vector<2x128xf32>
    %cst_60 = arith.constant 1.000000e+00 : f32
    %150 = vector.broadcast %cst_60 : f32 to vector<2x128xf32>
    %151 = arith.addf %150, %149 : vector<2x128xf32>
    %152 = arith.divf %150, %151 : vector<2x128xf32>
    %153 = math.tanh %147 : vector<2x128xf32>
    %154 = vector.extract_strided_slice %152 {offsets = [0, 0], sizes = [2, 32], strides = [1, 1]} : vector<2x128xf32> to vector<2x32xf32>
    %155 = vector.extract_strided_slice %152 {offsets = [0, 32], sizes = [2, 32], strides = [1, 1]} : vector<2x128xf32> to vector<2x32xf32>
    %156 = vector.extract_strided_slice %153 {offsets = [0, 64], sizes = [2, 32], strides = [1, 1]} : vector<2x128xf32> to vector<2x32xf32>
    %157 = vector.extract_strided_slice %152 {offsets = [0, 96], sizes = [2, 32], strides = [1, 1]} : vector<2x128xf32> to vector<2x32xf32>
    %158 = arith.mulf %155, %121 : vector<2x32xf32>
    %159 = arith.mulf %154, %156 : vector<2x32xf32>
    %160 = arith.addf %158, %159 : vector<2x32xf32>
    %161 = math.tanh %160 : vector<2x32xf32>
    %162 = arith.mulf %157, %161 : vector<2x32xf32>
    %163 = tpu.concatenate %162, %143 in 1 : vector<2x32xf32>, vector<2x32xf32> -> vector<2x64xf32>
    %164 = arith.truncf %163 : vector<2x64xf32> to vector<2x64xbf16>
    %cst_61 = arith.constant dense<0.000000e+00> : vector<2x128xf32>
    %165 = tpu.matmul %164, %99, %cst_61 {dimension_numbers = #tpu.dot_dimension_numbers<[1], [0], [0], [1], [0, 0, 1, 1], [], []>} : vector<2x64xbf16>, vector<64x128xbf16>, vector<2x128xf32> -> vector<2x128xf32>
    %166 = vector.broadcast %100 : vector<1x128xf32> to vector<2x128xf32>
    %167 = arith.addf %165, %166 : vector<2x128xf32>
    %168 = arith.negf %167 : vector<2x128xf32>
    %169 = math.exp %168 : vector<2x128xf32>
    %cst_62 = arith.constant 1.000000e+00 : f32
    %170 = vector.broadcast %cst_62 : f32 to vector<2x128xf32>
    %171 = arith.addf %170, %169 : vector<2x128xf32>
    %172 = arith.divf %170, %171 : vector<2x128xf32>
    %173 = math.tanh %167 : vector<2x128xf32>
    %174 = vector.extract_strided_slice %172 {offsets = [0, 0], sizes = [2, 32], strides = [1, 1]} : vector<2x128xf32> to vector<2x32xf32>
    %175 = vector.extract_strided_slice %172 {offsets = [0, 32], sizes = [2, 32], strides = [1, 1]} : vector<2x128xf32> to vector<2x32xf32>
    %176 = vector.extract_strided_slice %173 {offsets = [0, 64], sizes = [2, 32], strides = [1, 1]} : vector<2x128xf32> to vector<2x32xf32>
    %177 = vector.extract_strided_slice %172 {offsets = [0, 96], sizes = [2, 32], strides = [1, 1]} : vector<2x128xf32> to vector<2x32xf32>
    %178 = arith.mulf %175, %141 : vector<2x32xf32>
    %179 = arith.mulf %174, %176 : vector<2x32xf32>
    %180 = arith.addf %178, %179 : vector<2x32xf32>
    %181 = math.tanh %180 : vector<2x32xf32>
    %182 = arith.mulf %177, %181 : vector<2x32xf32>
    %c2 = arith.constant 2 : index
    %c0_63 = arith.constant 0 : index
    %183 = tpu.strided_load %arg14[%c2, %c0_63] {strides = array<i32: 8, 1>} : memref<16x128xf32, #tpu.memory_space<vmem>>, vector<2x128xf32>
    %184 = arith.truncf %162 : vector<2x32xf32> to vector<2x32xbf16>
    %cst_64 = arith.constant dense<0.000000e+00> : vector<2x128xf32>
    %185 = tpu.matmul %184, %98, %cst_64 {dimension_numbers = #tpu.dot_dimension_numbers<[1], [0], [0], [1], [0, 0, 1, 1], [], []>} : vector<2x32xbf16>, vector<32x128xbf16>, vector<2x128xf32> -> vector<2x128xf32>
    %186 = arith.addf %183, %185 : vector<2x128xf32>
    %187 = arith.negf %186 : vector<2x128xf32>
    %188 = math.exp %187 : vector<2x128xf32>
    %cst_65 = arith.constant 1.000000e+00 : f32
    %189 = vector.broadcast %cst_65 : f32 to vector<2x128xf32>
    %190 = arith.addf %189, %188 : vector<2x128xf32>
    %191 = arith.divf %189, %190 : vector<2x128xf32>
    %192 = math.tanh %186 : vector<2x128xf32>
    %193 = vector.extract_strided_slice %191 {offsets = [0, 0], sizes = [2, 32], strides = [1, 1]} : vector<2x128xf32> to vector<2x32xf32>
    %194 = vector.extract_strided_slice %191 {offsets = [0, 32], sizes = [2, 32], strides = [1, 1]} : vector<2x128xf32> to vector<2x32xf32>
    %195 = vector.extract_strided_slice %192 {offsets = [0, 64], sizes = [2, 32], strides = [1, 1]} : vector<2x128xf32> to vector<2x32xf32>
    %196 = vector.extract_strided_slice %191 {offsets = [0, 96], sizes = [2, 32], strides = [1, 1]} : vector<2x128xf32> to vector<2x32xf32>
    %197 = arith.mulf %194, %160 : vector<2x32xf32>
    %198 = arith.mulf %193, %195 : vector<2x32xf32>
    %199 = arith.addf %197, %198 : vector<2x32xf32>
    %200 = math.tanh %199 : vector<2x32xf32>
    %201 = arith.mulf %196, %200 : vector<2x32xf32>
    %202 = tpu.concatenate %201, %182 in 1 : vector<2x32xf32>, vector<2x32xf32> -> vector<2x64xf32>
    %203 = arith.truncf %202 : vector<2x64xf32> to vector<2x64xbf16>
    %cst_66 = arith.constant dense<0.000000e+00> : vector<2x128xf32>
    %204 = tpu.matmul %203, %99, %cst_66 {dimension_numbers = #tpu.dot_dimension_numbers<[1], [0], [0], [1], [0, 0, 1, 1], [], []>} : vector<2x64xbf16>, vector<64x128xbf16>, vector<2x128xf32> -> vector<2x128xf32>
    %205 = vector.broadcast %100 : vector<1x128xf32> to vector<2x128xf32>
    %206 = arith.addf %204, %205 : vector<2x128xf32>
    %207 = arith.negf %206 : vector<2x128xf32>
    %208 = math.exp %207 : vector<2x128xf32>
    %cst_67 = arith.constant 1.000000e+00 : f32
    %209 = vector.broadcast %cst_67 : f32 to vector<2x128xf32>
    %210 = arith.addf %209, %208 : vector<2x128xf32>
    %211 = arith.divf %209, %210 : vector<2x128xf32>
    %212 = math.tanh %206 : vector<2x128xf32>
    %213 = vector.extract_strided_slice %211 {offsets = [0, 0], sizes = [2, 32], strides = [1, 1]} : vector<2x128xf32> to vector<2x32xf32>
    %214 = vector.extract_strided_slice %211 {offsets = [0, 32], sizes = [2, 32], strides = [1, 1]} : vector<2x128xf32> to vector<2x32xf32>
    %215 = vector.extract_strided_slice %212 {offsets = [0, 64], sizes = [2, 32], strides = [1, 1]} : vector<2x128xf32> to vector<2x32xf32>
    %216 = vector.extract_strided_slice %211 {offsets = [0, 96], sizes = [2, 32], strides = [1, 1]} : vector<2x128xf32> to vector<2x32xf32>
    %217 = arith.mulf %214, %180 : vector<2x32xf32>
    %218 = arith.mulf %213, %215 : vector<2x32xf32>
    %219 = arith.addf %217, %218 : vector<2x32xf32>
    %220 = math.tanh %219 : vector<2x32xf32>
    %221 = arith.mulf %216, %220 : vector<2x32xf32>
    %c3 = arith.constant 3 : index
    %c0_68 = arith.constant 0 : index
    %222 = tpu.strided_load %arg14[%c3, %c0_68] {strides = array<i32: 8, 1>} : memref<16x128xf32, #tpu.memory_space<vmem>>, vector<2x128xf32>
    %223 = arith.truncf %201 : vector<2x32xf32> to vector<2x32xbf16>
    %cst_69 = arith.constant dense<0.000000e+00> : vector<2x128xf32>
    %224 = tpu.matmul %223, %98, %cst_69 {dimension_numbers = #tpu.dot_dimension_numbers<[1], [0], [0], [1], [0, 0, 1, 1], [], []>} : vector<2x32xbf16>, vector<32x128xbf16>, vector<2x128xf32> -> vector<2x128xf32>
    %225 = arith.addf %222, %224 : vector<2x128xf32>
    %226 = arith.negf %225 : vector<2x128xf32>
    %227 = math.exp %226 : vector<2x128xf32>
    %cst_70 = arith.constant 1.000000e+00 : f32
    %228 = vector.broadcast %cst_70 : f32 to vector<2x128xf32>
    %229 = arith.addf %228, %227 : vector<2x128xf32>
    %230 = arith.divf %228, %229 : vector<2x128xf32>
    %231 = math.tanh %225 : vector<2x128xf32>
    %232 = vector.extract_strided_slice %230 {offsets = [0, 0], sizes = [2, 32], strides = [1, 1]} : vector<2x128xf32> to vector<2x32xf32>
    %233 = vector.extract_strided_slice %230 {offsets = [0, 32], sizes = [2, 32], strides = [1, 1]} : vector<2x128xf32> to vector<2x32xf32>
    %234 = vector.extract_strided_slice %231 {offsets = [0, 64], sizes = [2, 32], strides = [1, 1]} : vector<2x128xf32> to vector<2x32xf32>
    %235 = vector.extract_strided_slice %230 {offsets = [0, 96], sizes = [2, 32], strides = [1, 1]} : vector<2x128xf32> to vector<2x32xf32>
    %236 = arith.mulf %233, %199 : vector<2x32xf32>
    %237 = arith.mulf %232, %234 : vector<2x32xf32>
    %238 = arith.addf %236, %237 : vector<2x32xf32>
    %239 = math.tanh %238 : vector<2x32xf32>
    %240 = arith.mulf %235, %239 : vector<2x32xf32>
    %241 = tpu.concatenate %240, %221 in 1 : vector<2x32xf32>, vector<2x32xf32> -> vector<2x64xf32>
    %242 = arith.truncf %241 : vector<2x64xf32> to vector<2x64xbf16>
    %cst_71 = arith.constant dense<0.000000e+00> : vector<2x128xf32>
    %243 = tpu.matmul %242, %99, %cst_71 {dimension_numbers = #tpu.dot_dimension_numbers<[1], [0], [0], [1], [0, 0, 1, 1], [], []>} : vector<2x64xbf16>, vector<64x128xbf16>, vector<2x128xf32> -> vector<2x128xf32>
    %244 = vector.broadcast %100 : vector<1x128xf32> to vector<2x128xf32>
    %245 = arith.addf %243, %244 : vector<2x128xf32>
    %246 = arith.negf %245 : vector<2x128xf32>
    %247 = math.exp %246 : vector<2x128xf32>
    %cst_72 = arith.constant 1.000000e+00 : f32
    %248 = vector.broadcast %cst_72 : f32 to vector<2x128xf32>
    %249 = arith.addf %248, %247 : vector<2x128xf32>
    %250 = arith.divf %248, %249 : vector<2x128xf32>
    %251 = math.tanh %245 : vector<2x128xf32>
    %252 = vector.extract_strided_slice %250 {offsets = [0, 0], sizes = [2, 32], strides = [1, 1]} : vector<2x128xf32> to vector<2x32xf32>
    %253 = vector.extract_strided_slice %250 {offsets = [0, 32], sizes = [2, 32], strides = [1, 1]} : vector<2x128xf32> to vector<2x32xf32>
    %254 = vector.extract_strided_slice %251 {offsets = [0, 64], sizes = [2, 32], strides = [1, 1]} : vector<2x128xf32> to vector<2x32xf32>
    %255 = vector.extract_strided_slice %250 {offsets = [0, 96], sizes = [2, 32], strides = [1, 1]} : vector<2x128xf32> to vector<2x32xf32>
    %256 = arith.mulf %253, %219 : vector<2x32xf32>
    %257 = arith.mulf %252, %254 : vector<2x32xf32>
    %258 = arith.addf %256, %257 : vector<2x32xf32>
    %259 = math.tanh %258 : vector<2x32xf32>
    %260 = arith.mulf %255, %259 : vector<2x32xf32>
    %c4 = arith.constant 4 : index
    %c0_73 = arith.constant 0 : index
    %261 = tpu.strided_load %arg14[%c4, %c0_73] {strides = array<i32: 8, 1>} : memref<16x128xf32, #tpu.memory_space<vmem>>, vector<2x128xf32>
    %262 = arith.truncf %240 : vector<2x32xf32> to vector<2x32xbf16>
    %cst_74 = arith.constant dense<0.000000e+00> : vector<2x128xf32>
    %263 = tpu.matmul %262, %98, %cst_74 {dimension_numbers = #tpu.dot_dimension_numbers<[1], [0], [0], [1], [0, 0, 1, 1], [], []>} : vector<2x32xbf16>, vector<32x128xbf16>, vector<2x128xf32> -> vector<2x128xf32>
    %264 = arith.addf %261, %263 : vector<2x128xf32>
    %265 = arith.negf %264 : vector<2x128xf32>
    %266 = math.exp %265 : vector<2x128xf32>
    %cst_75 = arith.constant 1.000000e+00 : f32
    %267 = vector.broadcast %cst_75 : f32 to vector<2x128xf32>
    %268 = arith.addf %267, %266 : vector<2x128xf32>
    %269 = arith.divf %267, %268 : vector<2x128xf32>
    %270 = math.tanh %264 : vector<2x128xf32>
    %271 = vector.extract_strided_slice %269 {offsets = [0, 0], sizes = [2, 32], strides = [1, 1]} : vector<2x128xf32> to vector<2x32xf32>
    %272 = vector.extract_strided_slice %269 {offsets = [0, 32], sizes = [2, 32], strides = [1, 1]} : vector<2x128xf32> to vector<2x32xf32>
    %273 = vector.extract_strided_slice %270 {offsets = [0, 64], sizes = [2, 32], strides = [1, 1]} : vector<2x128xf32> to vector<2x32xf32>
    %274 = vector.extract_strided_slice %269 {offsets = [0, 96], sizes = [2, 32], strides = [1, 1]} : vector<2x128xf32> to vector<2x32xf32>
    %275 = arith.mulf %272, %238 : vector<2x32xf32>
    %276 = arith.mulf %271, %273 : vector<2x32xf32>
    %277 = arith.addf %275, %276 : vector<2x32xf32>
    %278 = math.tanh %277 : vector<2x32xf32>
    %279 = arith.mulf %274, %278 : vector<2x32xf32>
    %280 = tpu.concatenate %279, %260 in 1 : vector<2x32xf32>, vector<2x32xf32> -> vector<2x64xf32>
    %281 = arith.truncf %280 : vector<2x64xf32> to vector<2x64xbf16>
    %cst_76 = arith.constant dense<0.000000e+00> : vector<2x128xf32>
    %282 = tpu.matmul %281, %99, %cst_76 {dimension_numbers = #tpu.dot_dimension_numbers<[1], [0], [0], [1], [0, 0, 1, 1], [], []>} : vector<2x64xbf16>, vector<64x128xbf16>, vector<2x128xf32> -> vector<2x128xf32>
    %283 = vector.broadcast %100 : vector<1x128xf32> to vector<2x128xf32>
    %284 = arith.addf %282, %283 : vector<2x128xf32>
    %285 = arith.negf %284 : vector<2x128xf32>
    %286 = math.exp %285 : vector<2x128xf32>
    %cst_77 = arith.constant 1.000000e+00 : f32
    %287 = vector.broadcast %cst_77 : f32 to vector<2x128xf32>
    %288 = arith.addf %287, %286 : vector<2x128xf32>
    %289 = arith.divf %287, %288 : vector<2x128xf32>
    %290 = math.tanh %284 : vector<2x128xf32>
    %291 = vector.extract_strided_slice %289 {offsets = [0, 0], sizes = [2, 32], strides = [1, 1]} : vector<2x128xf32> to vector<2x32xf32>
    %292 = vector.extract_strided_slice %289 {offsets = [0, 32], sizes = [2, 32], strides = [1, 1]} : vector<2x128xf32> to vector<2x32xf32>
    %293 = vector.extract_strided_slice %290 {offsets = [0, 64], sizes = [2, 32], strides = [1, 1]} : vector<2x128xf32> to vector<2x32xf32>
    %294 = vector.extract_strided_slice %289 {offsets = [0, 96], sizes = [2, 32], strides = [1, 1]} : vector<2x128xf32> to vector<2x32xf32>
    %295 = arith.mulf %292, %258 : vector<2x32xf32>
    %296 = arith.mulf %291, %293 : vector<2x32xf32>
    %297 = arith.addf %295, %296 : vector<2x32xf32>
    %298 = math.tanh %297 : vector<2x32xf32>
    %299 = arith.mulf %294, %298 : vector<2x32xf32>
    %c5 = arith.constant 5 : index
    %c0_78 = arith.constant 0 : index
    %300 = tpu.strided_load %arg14[%c5, %c0_78] {strides = array<i32: 8, 1>} : memref<16x128xf32, #tpu.memory_space<vmem>>, vector<2x128xf32>
    %301 = arith.truncf %279 : vector<2x32xf32> to vector<2x32xbf16>
    %cst_79 = arith.constant dense<0.000000e+00> : vector<2x128xf32>
    %302 = tpu.matmul %301, %98, %cst_79 {dimension_numbers = #tpu.dot_dimension_numbers<[1], [0], [0], [1], [0, 0, 1, 1], [], []>} : vector<2x32xbf16>, vector<32x128xbf16>, vector<2x128xf32> -> vector<2x128xf32>
    %303 = arith.addf %300, %302 : vector<2x128xf32>
    %304 = arith.negf %303 : vector<2x128xf32>
    %305 = math.exp %304 : vector<2x128xf32>
    %cst_80 = arith.constant 1.000000e+00 : f32
    %306 = vector.broadcast %cst_80 : f32 to vector<2x128xf32>
    %307 = arith.addf %306, %305 : vector<2x128xf32>
    %308 = arith.divf %306, %307 : vector<2x128xf32>
    %309 = math.tanh %303 : vector<2x128xf32>
    %310 = vector.extract_strided_slice %308 {offsets = [0, 0], sizes = [2, 32], strides = [1, 1]} : vector<2x128xf32> to vector<2x32xf32>
    %311 = vector.extract_strided_slice %308 {offsets = [0, 32], sizes = [2, 32], strides = [1, 1]} : vector<2x128xf32> to vector<2x32xf32>
    %312 = vector.extract_strided_slice %309 {offsets = [0, 64], sizes = [2, 32], strides = [1, 1]} : vector<2x128xf32> to vector<2x32xf32>
    %313 = vector.extract_strided_slice %308 {offsets = [0, 96], sizes = [2, 32], strides = [1, 1]} : vector<2x128xf32> to vector<2x32xf32>
    %314 = arith.mulf %311, %277 : vector<2x32xf32>
    %315 = arith.mulf %310, %312 : vector<2x32xf32>
    %316 = arith.addf %314, %315 : vector<2x32xf32>
    %317 = math.tanh %316 : vector<2x32xf32>
    %318 = arith.mulf %313, %317 : vector<2x32xf32>
    %319 = tpu.concatenate %318, %299 in 1 : vector<2x32xf32>, vector<2x32xf32> -> vector<2x64xf32>
    %320 = arith.truncf %319 : vector<2x64xf32> to vector<2x64xbf16>
    %cst_81 = arith.constant dense<0.000000e+00> : vector<2x128xf32>
    %321 = tpu.matmul %320, %99, %cst_81 {dimension_numbers = #tpu.dot_dimension_numbers<[1], [0], [0], [1], [0, 0, 1, 1], [], []>} : vector<2x64xbf16>, vector<64x128xbf16>, vector<2x128xf32> -> vector<2x128xf32>
    %322 = vector.broadcast %100 : vector<1x128xf32> to vector<2x128xf32>
    %323 = arith.addf %321, %322 : vector<2x128xf32>
    %324 = arith.negf %323 : vector<2x128xf32>
    %325 = math.exp %324 : vector<2x128xf32>
    %cst_82 = arith.constant 1.000000e+00 : f32
    %326 = vector.broadcast %cst_82 : f32 to vector<2x128xf32>
    %327 = arith.addf %326, %325 : vector<2x128xf32>
    %328 = arith.divf %326, %327 : vector<2x128xf32>
    %329 = math.tanh %323 : vector<2x128xf32>
    %330 = vector.extract_strided_slice %328 {offsets = [0, 0], sizes = [2, 32], strides = [1, 1]} : vector<2x128xf32> to vector<2x32xf32>
    %331 = vector.extract_strided_slice %328 {offsets = [0, 32], sizes = [2, 32], strides = [1, 1]} : vector<2x128xf32> to vector<2x32xf32>
    %332 = vector.extract_strided_slice %329 {offsets = [0, 64], sizes = [2, 32], strides = [1, 1]} : vector<2x128xf32> to vector<2x32xf32>
    %333 = vector.extract_strided_slice %328 {offsets = [0, 96], sizes = [2, 32], strides = [1, 1]} : vector<2x128xf32> to vector<2x32xf32>
    %334 = arith.mulf %331, %297 : vector<2x32xf32>
    %335 = arith.mulf %330, %332 : vector<2x32xf32>
    %336 = arith.addf %334, %335 : vector<2x32xf32>
    %337 = math.tanh %336 : vector<2x32xf32>
    %338 = arith.mulf %333, %337 : vector<2x32xf32>
    %c6 = arith.constant 6 : index
    %c0_83 = arith.constant 0 : index
    %339 = tpu.strided_load %arg14[%c6, %c0_83] {strides = array<i32: 8, 1>} : memref<16x128xf32, #tpu.memory_space<vmem>>, vector<2x128xf32>
    %340 = arith.truncf %318 : vector<2x32xf32> to vector<2x32xbf16>
    %cst_84 = arith.constant dense<0.000000e+00> : vector<2x128xf32>
    %341 = tpu.matmul %340, %98, %cst_84 {dimension_numbers = #tpu.dot_dimension_numbers<[1], [0], [0], [1], [0, 0, 1, 1], [], []>} : vector<2x32xbf16>, vector<32x128xbf16>, vector<2x128xf32> -> vector<2x128xf32>
    %342 = arith.addf %339, %341 : vector<2x128xf32>
    %343 = arith.negf %342 : vector<2x128xf32>
    %344 = math.exp %343 : vector<2x128xf32>
    %cst_85 = arith.constant 1.000000e+00 : f32
    %345 = vector.broadcast %cst_85 : f32 to vector<2x128xf32>
    %346 = arith.addf %345, %344 : vector<2x128xf32>
    %347 = arith.divf %345, %346 : vector<2x128xf32>
    %348 = math.tanh %342 : vector<2x128xf32>
    %349 = vector.extract_strided_slice %347 {offsets = [0, 0], sizes = [2, 32], strides = [1, 1]} : vector<2x128xf32> to vector<2x32xf32>
    %350 = vector.extract_strided_slice %347 {offsets = [0, 32], sizes = [2, 32], strides = [1, 1]} : vector<2x128xf32> to vector<2x32xf32>
    %351 = vector.extract_strided_slice %348 {offsets = [0, 64], sizes = [2, 32], strides = [1, 1]} : vector<2x128xf32> to vector<2x32xf32>
    %352 = vector.extract_strided_slice %347 {offsets = [0, 96], sizes = [2, 32], strides = [1, 1]} : vector<2x128xf32> to vector<2x32xf32>
    %353 = arith.mulf %350, %316 : vector<2x32xf32>
    %354 = arith.mulf %349, %351 : vector<2x32xf32>
    %355 = arith.addf %353, %354 : vector<2x32xf32>
    %356 = math.tanh %355 : vector<2x32xf32>
    %357 = arith.mulf %352, %356 : vector<2x32xf32>
    %358 = tpu.concatenate %357, %338 in 1 : vector<2x32xf32>, vector<2x32xf32> -> vector<2x64xf32>
    %359 = arith.truncf %358 : vector<2x64xf32> to vector<2x64xbf16>
    %cst_86 = arith.constant dense<0.000000e+00> : vector<2x128xf32>
    %360 = tpu.matmul %359, %99, %cst_86 {dimension_numbers = #tpu.dot_dimension_numbers<[1], [0], [0], [1], [0, 0, 1, 1], [], []>} : vector<2x64xbf16>, vector<64x128xbf16>, vector<2x128xf32> -> vector<2x128xf32>
    %361 = vector.broadcast %100 : vector<1x128xf32> to vector<2x128xf32>
    %362 = arith.addf %360, %361 : vector<2x128xf32>
    %363 = arith.negf %362 : vector<2x128xf32>
    %364 = math.exp %363 : vector<2x128xf32>
    %cst_87 = arith.constant 1.000000e+00 : f32
    %365 = vector.broadcast %cst_87 : f32 to vector<2x128xf32>
    %366 = arith.addf %365, %364 : vector<2x128xf32>
    %367 = arith.divf %365, %366 : vector<2x128xf32>
    %368 = math.tanh %362 : vector<2x128xf32>
    %369 = vector.extract_strided_slice %367 {offsets = [0, 0], sizes = [2, 32], strides = [1, 1]} : vector<2x128xf32> to vector<2x32xf32>
    %370 = vector.extract_strided_slice %367 {offsets = [0, 32], sizes = [2, 32], strides = [1, 1]} : vector<2x128xf32> to vector<2x32xf32>
    %371 = vector.extract_strided_slice %368 {offsets = [0, 64], sizes = [2, 32], strides = [1, 1]} : vector<2x128xf32> to vector<2x32xf32>
    %372 = vector.extract_strided_slice %367 {offsets = [0, 96], sizes = [2, 32], strides = [1, 1]} : vector<2x128xf32> to vector<2x32xf32>
    %373 = arith.mulf %370, %336 : vector<2x32xf32>
    %374 = arith.mulf %369, %371 : vector<2x32xf32>
    %375 = arith.addf %373, %374 : vector<2x32xf32>
    %376 = math.tanh %375 : vector<2x32xf32>
    %377 = arith.mulf %372, %376 : vector<2x32xf32>
    %c7 = arith.constant 7 : index
    %c0_88 = arith.constant 0 : index
    %378 = tpu.strided_load %arg14[%c7, %c0_88] {strides = array<i32: 8, 1>} : memref<16x128xf32, #tpu.memory_space<vmem>>, vector<2x128xf32>
    %379 = arith.truncf %357 : vector<2x32xf32> to vector<2x32xbf16>
    %cst_89 = arith.constant dense<0.000000e+00> : vector<2x128xf32>
    %380 = tpu.matmul %379, %98, %cst_89 {dimension_numbers = #tpu.dot_dimension_numbers<[1], [0], [0], [1], [0, 0, 1, 1], [], []>} : vector<2x32xbf16>, vector<32x128xbf16>, vector<2x128xf32> -> vector<2x128xf32>
    %381 = arith.addf %378, %380 : vector<2x128xf32>
    %382 = arith.negf %381 : vector<2x128xf32>
    %383 = math.exp %382 : vector<2x128xf32>
    %cst_90 = arith.constant 1.000000e+00 : f32
    %384 = vector.broadcast %cst_90 : f32 to vector<2x128xf32>
    %385 = arith.addf %384, %383 : vector<2x128xf32>
    %386 = arith.divf %384, %385 : vector<2x128xf32>
    %387 = math.tanh %381 : vector<2x128xf32>
    %388 = vector.extract_strided_slice %386 {offsets = [0, 0], sizes = [2, 32], strides = [1, 1]} : vector<2x128xf32> to vector<2x32xf32>
    %389 = vector.extract_strided_slice %386 {offsets = [0, 32], sizes = [2, 32], strides = [1, 1]} : vector<2x128xf32> to vector<2x32xf32>
    %390 = vector.extract_strided_slice %387 {offsets = [0, 64], sizes = [2, 32], strides = [1, 1]} : vector<2x128xf32> to vector<2x32xf32>
    %391 = vector.extract_strided_slice %386 {offsets = [0, 96], sizes = [2, 32], strides = [1, 1]} : vector<2x128xf32> to vector<2x32xf32>
    %392 = arith.mulf %389, %355 : vector<2x32xf32>
    %393 = arith.mulf %388, %390 : vector<2x32xf32>
    %394 = arith.addf %392, %393 : vector<2x32xf32>
    %395 = math.tanh %394 : vector<2x32xf32>
    %396 = arith.mulf %391, %395 : vector<2x32xf32>
    %397 = tpu.concatenate %396, %377 in 1 : vector<2x32xf32>, vector<2x32xf32> -> vector<2x64xf32>
    %398 = arith.truncf %397 : vector<2x64xf32> to vector<2x64xbf16>
    %cst_91 = arith.constant dense<0.000000e+00> : vector<2x128xf32>
    %399 = tpu.matmul %398, %99, %cst_91 {dimension_numbers = #tpu.dot_dimension_numbers<[1], [0], [0], [1], [0, 0, 1, 1], [], []>} : vector<2x64xbf16>, vector<64x128xbf16>, vector<2x128xf32> -> vector<2x128xf32>
    %400 = vector.broadcast %100 : vector<1x128xf32> to vector<2x128xf32>
    %401 = arith.addf %399, %400 : vector<2x128xf32>
    %402 = arith.negf %401 : vector<2x128xf32>
    %403 = math.exp %402 : vector<2x128xf32>
    %cst_92 = arith.constant 1.000000e+00 : f32
    %404 = vector.broadcast %cst_92 : f32 to vector<2x128xf32>
    %405 = arith.addf %404, %403 : vector<2x128xf32>
    %406 = arith.divf %404, %405 : vector<2x128xf32>
    %407 = math.tanh %401 : vector<2x128xf32>
    %408 = vector.extract_strided_slice %406 {offsets = [0, 0], sizes = [2, 32], strides = [1, 1]} : vector<2x128xf32> to vector<2x32xf32>
    %409 = vector.extract_strided_slice %406 {offsets = [0, 32], sizes = [2, 32], strides = [1, 1]} : vector<2x128xf32> to vector<2x32xf32>
    %410 = vector.extract_strided_slice %407 {offsets = [0, 64], sizes = [2, 32], strides = [1, 1]} : vector<2x128xf32> to vector<2x32xf32>
    %411 = vector.extract_strided_slice %406 {offsets = [0, 96], sizes = [2, 32], strides = [1, 1]} : vector<2x128xf32> to vector<2x32xf32>
    %412 = arith.mulf %409, %375 : vector<2x32xf32>
    %413 = arith.mulf %408, %410 : vector<2x32xf32>
    %414 = arith.addf %412, %413 : vector<2x32xf32>
    %415 = math.tanh %414 : vector<2x32xf32>
    %416 = arith.mulf %411, %415 : vector<2x32xf32>
    %c0_93 = arith.constant 0 : index
    %c0_94 = arith.constant 0 : index
    %417 = vector.load %arg12[%c0_93, %c0_94] : memref<2x32xf32, #tpu.memory_space<vmem>>, vector<2x32xf32>
    tpu.vector_store %arg12[%c0_93, %c0_94], %416 {strides = array<i32>} : memref<2x32xf32, #tpu.memory_space<vmem>>, vector<2x32xf32>,
    return
  }
  func.func @transform_0(%arg0: i32) -> (i32, i32) {
    %c0_i32 = arith.constant 0 : i32
    %c0_i32_0 = arith.constant 0 : i32
    return %arg0, %c0_i32 : i32, i32
  }
  func.func @transform_1(%arg0: i32) -> (i32, i32) {
    %c0_i32 = arith.constant 0 : i32
    %c0_i32_0 = arith.constant 0 : i32
    %c0_i32_1 = arith.constant 0 : i32
    return %c0_i32, %c0_i32_0 : i32, i32
  }
  func.func @transform_2(%arg0: i32) -> (i32, i32) {
    %c0_i32 = arith.constant 0 : i32
    %c0_i32_0 = arith.constant 0 : i32
    %c0_i32_1 = arith.constant 0 : i32
    return %c0_i32, %c0_i32_0 : i32, i32
  }
  func.func @transform_3(%arg0: i32) -> (i32, i32) {
    %c0_i32 = arith.constant 0 : i32
    %c0_i32_0 = arith.constant 0 : i32
    %c0_i32_1 = arith.constant 0 : i32
    return %c0_i32, %c0_i32_0 : i32, i32
  }
  func.func @transform_4(%arg0: i32) -> (i32, i32) {
    %c0_i32 = arith.constant 0 : i32
    %c0_i32_0 = arith.constant 0 : i32
    %c0_i32_1 = arith.constant 0 : i32
    return %c0_i32, %c0_i32_0 : i32, i32
  }
  func.func @transform_5(%arg0: i32) -> (i32, i32) {
    %c0_i32 = arith.constant 0 : i32
    %c0_i32_0 = arith.constant 0 : i32
    %c0_i32_1 = arith.constant 0 : i32
    return %c0_i32, %c0_i32_0 : i32, i32
  }
  func.func @transform_6(%arg0: i32) -> (i32, i32) {
    %c0_i32 = arith.constant 0 : i32
    %c0_i32_0 = arith.constant 0 : i32
    %c0_i32_1 = arith.constant 0 : i32
    return %c0_i32, %c0_i32_0 : i32, i32
  }
  func.func @transform_7(%arg0: i32) -> (i32, i32) {
    %c0_i32 = arith.constant 0 : i32
    %c0_i32_0 = arith.constant 0 : i32
    %c0_i32_1 = arith.constant 0 : i32
    return %c0_i32, %c0_i32_0 : i32, i32
  }
  func.func @transform_8(%arg0: i32) -> (i32, i32) {
    %c0_i32 = arith.constant 0 : i32
    %c0_i32_0 = arith.constant 0 : i32
    %c0_i32_1 = arith.constant 0 : i32
    return %c0_i32, %c0_i32_0 : i32, i32
  }
  func.func @transform_9(%arg0: i32) -> (i32, i32) {
    %c0_i32 = arith.constant 0 : i32
    %c0_i32_0 = arith.constant 0 : i32
    %c0_i32_1 = arith.constant 0 : i32
    return %c0_i32, %c0_i32_0 : i32, i32
  }
  func.func @transform_10(%arg0: i32) -> (i32, i32) {
    %c0_i32 = arith.constant 0 : i32
    %c0_i32_0 = arith.constant 0 : i32
    %c0_i32_1 = arith.constant 0 : i32
    return %c0_i32, %c0_i32_0 : i32, i32
  }
  func.func @transform_11(%arg0: i32) -> (i32, i32) {
    %c0_i32 = arith.constant 0 : i32
    %c0_i32_0 = arith.constant 0 : i32
    return %arg0, %c0_i32 : i32, i32
  }
}

</mosaic_0001>

<llo_original>
// kernel: tpu_custom_call.1
$region0: #{tpu_custom_call.1}
  #allocation0 [shape = 'u32[]', space=smem, size = 0x4, offset = 0x4, fixed_abs, tag = 'smem constant byte address 0x4 - core index']
  #allocation1 [shape = 'u32[72,128]{1,0:T(1,128)}', space=vmem, size = 0x9000, scoped, tag = 'internal scratch']
  #allocation2 [shape = 'f32[32,32]{1,0:T(8,128)}', space=vmem, size = 0x4000, scoped, tag = 'scratch operand']
  #allocation3 [shape = 'f32[16,128]{1,0:T(8,128)}', space=vmem, size = 0x2000, scoped, tag = 'scratch operand']
  %s0 = inlined_call_operand.vmem [shape: f32[32,4], index: 0, kind: input, shape index: {}]
  %s1 = inlined_call_operand.vmem [shape: f32[1,4], index: 1, kind: input, shape index: {}]
  %s2 = inlined_call_operand.vmem [shape: f32[1,4], index: 2, kind: input, shape index: {}]
  %s3 = inlined_call_operand.vmem [shape: bf16[4,16], index: 3, kind: input, shape index: {}]
  %s4 = inlined_call_operand.vmem [shape: bf16[128,64], index: 4, kind: input, shape index: {}]
  %s5 = inlined_call_operand.vmem [shape: f32[1,64], index: 5, kind: input, shape index: {}]
  %s6 = inlined_call_operand.vmem [shape: bf16[32,128], index: 6, kind: input, shape index: {}]
  %s7 = inlined_call_operand.vmem [shape: bf16[32,128], index: 7, kind: input, shape index: {}]
  %s8 = inlined_call_operand.vmem [shape: f32[1,128], index: 8, kind: input, shape index: {}]
  %s9 = inlined_call_operand.vmem [shape: bf16[64,128], index: 9, kind: input, shape index: {}]
  %s10 = inlined_call_operand.vmem [shape: f32[1,128], index: 10, kind: input, shape index: {}]
  %s11 = inlined_call_operand.hbm [shape: f32[2,32], index: 11, kind: output, shape index: {}]
  %s12 = sld [smem:[#allocation0]]
  $region54: #{tpu_custom_call.1} parent=0
    _
  %s14 = ssub.s32 1, %s12
  %s15 = scalar_select 0, %s14, %s12
  $region1: #{tpu_custom_call.1} parent=0
    #allocation4 [shape = 'u8[1024]{0}', space=vmem, size = 0x400, scoped, tag = 'output window, operand 0, single buffered']
    #allocation5 [shape = 's32[1]{0}', space=sflag, size = 0x4, scoped, tag = 'scoped memory for tpu_custom_call.1']
    %16 = vsyncpa [#allocation5], 0
    // Predicated region
    $region2: #{tpu_custom_call.1} parent=1 // pred_check
      _
    $region3: #{tpu_custom_call.1} parent=1 // pred_check_branch
      %18 = sbr.rel (0) target = $region5
    $region4: #{tpu_custom_call.1} parent=1 // pred_region
      _
    $region5: #{tpu_custom_call.1} parent=1 // pred_fallthru
      _
    // Predicated region
    $region6: #{tpu_custom_call.1} parent=1 // pred_check
      _
    $region7: #{tpu_custom_call.1} parent=1 // pred_check_branch
      %20 = sbr.rel (0) target = $region9
    $region8: #{tpu_custom_call.1} parent=1 // pred_region
      _
    $region9: #{tpu_custom_call.1} parent=1 // pred_fallthru
      _
    // Predicated region
    $region10: #{tpu_custom_call.1} parent=1 // pred_check
      _
    $region11: #{tpu_custom_call.1} parent=1 // pred_check_branch
      %22 = sbr.rel (0) target = $region13
    $region12: #{tpu_custom_call.1} parent=1 // pred_region
      _
    $region13: #{tpu_custom_call.1} parent=1 // pred_fallthru
      _
    // Predicated region
    $region14: #{tpu_custom_call.1} parent=1 // pred_check
      _
    $region15: #{tpu_custom_call.1} parent=1 // pred_check_branch
      %24 = sbr.rel (0) target = $region17
    $region16: #{tpu_custom_call.1} parent=1 // pred_region
      _
    $region17: #{tpu_custom_call.1} parent=1 // pred_fallthru
      _
    // Predicated region
    $region18: #{tpu_custom_call.1} parent=1 // pred_check
      _
    $region19: #{tpu_custom_call.1} parent=1 // pred_check_branch
      %26 = sbr.rel (0) target = $region21
    $region20: #{tpu_custom_call.1} parent=1 // pred_region
      _
    $region21: #{tpu_custom_call.1} parent=1 // pred_fallthru
      _
    // Predicated region
    $region22: #{tpu_custom_call.1} parent=1 // pred_check
      _
    $region23: #{tpu_custom_call.1} parent=1 // pred_check_branch
      %28 = sbr.rel (0) target = $region25
    $region24: #{tpu_custom_call.1} parent=1 // pred_region
      _
    $region25: #{tpu_custom_call.1} parent=1 // pred_fallthru
      _
    // Predicated region
    $region26: #{tpu_custom_call.1} parent=1 // pred_check
      _
    $region27: #{tpu_custom_call.1} parent=1 // pred_check_branch
      %30 = sbr.rel (0) target = $region29
    $region28: #{tpu_custom_call.1} parent=1 // pred_region
      _
    $region29: #{tpu_custom_call.1} parent=1 // pred_fallthru
      _
    // Predicated region
    $region30: #{tpu_custom_call.1} parent=1 // pred_check
      _
    $region31: #{tpu_custom_call.1} parent=1 // pred_check_branch
      %32 = sbr.rel (0) target = $region33
    $region32: #{tpu_custom_call.1} parent=1 // pred_region
      _
    $region33: #{tpu_custom_call.1} parent=1 // pred_fallthru
      _
    // Predicated region
    $region34: #{tpu_custom_call.1} parent=1 // pred_check
      _
    $region35: #{tpu_custom_call.1} parent=1 // pred_check_branch
      %34 = sbr.rel (0) target = $region37
    $region36: #{tpu_custom_call.1} parent=1 // pred_region
      _
    $region37: #{tpu_custom_call.1} parent=1 // pred_fallthru
      _
    // Predicated region
    $region38: #{tpu_custom_call.1} parent=1 // pred_check
      _
    $region39: #{tpu_custom_call.1} parent=1 // pred_check_branch
      %36 = sbr.rel (0) target = $region41
    $region40: #{tpu_custom_call.1} parent=1 // pred_region
      _
    $region41: #{tpu_custom_call.1} parent=1 // pred_fallthru
      _
    // Predicated region
    $region42: #{tpu_custom_call.1} parent=1 // pred_check
      _
    $region43: #{tpu_custom_call.1} parent=1 // pred_check_branch
      %38 = sbr.rel (0) target = $region45
    $region44: #{tpu_custom_call.1} parent=1 // pred_region
      _
    $region45: #{tpu_custom_call.1} parent=1 // pred_fallthru
      _
    %v40 = vlaneseq
    %v41 = vshrl.u32 %v40, 7
    %v42 = vadd.s32 %v41, 8
    %v43 = vadd.s32 %v41, 16
    %v44 = vadd.s32 %v41, 24
    %vm45 = vcmp.ge.s32.totalorder %v41, 16
    %vm46 = vcmp.ge.s32.totalorder %v42, 16
    %vm47 = vcmp.ge.s32.totalorder %v43, 16
    %vm48 = vcmp.ge.s32.totalorder %v44, 16
    %v49 = vsub.s32 %v41, 16
    %v50 = vsub.s32 %v42, 16
    %v51 = vsub.s32 %v44, 16
    %v52 = vsel %vm45, %v49, %v41
    %v53 = vsel %vm46, %v50, %v42
    %v54 = vsel %vm47, %v41, %v43
    %v55 = vsel %vm48, %v51, %v44
    %v56 = vld [vmem:[%s0] sm:$0xff]
    %v57 = vld [vmem:[%s0 + $0x8] sm:$0xff]
    %v58 = vld [vmem:[%s0 + $0x10] sm:$0xff]
    %v59 = vld [vmem:[%s0 + $0x18] sm:$0xff]
    %v60 = vld [vmem:[%s1] sm:$0x1]
    %v62 = vperm.slane %v60, 0
    %v64 = vmul.f32 %v56, %v62
    %v65 = vmul.f32 %v57, %v62
    %v66 = vmul.f32 %v58, %v62
    %v67 = vmul.f32 %v59, %v62
    %v68 = vld [vmem:[%s2] sm:$0x1]
    %v70 = vperm.slane %v68, 0
    %v72 = vadd.f32 %v64, %v70
    %v73 = vadd.f32 %v65, %v70
    %v74 = vadd.f32 %v66, %v70
    %v75 = vadd.f32 %v67, %v70
    %v76 = vrot.slane %v72, 7
    %v77 = vrot.slane %v73, 7
    %v78 = vrot.slane %v74, 7
    %v79 = vrot.slane %v75, 7
    %vm80 = vcmp.lt.s32.totalorder %v41, 1
    %v81 = vsel %vm80, %v78, %v79
    %v82 = vsel %vm80, %v77, %v78
    %v83 = vsel %vm80, %v76, %v77
    %v84 = vsel %vm80, %v79, %v76
    %vm85 = vcmp.ge.s32.totalorder %v52, 1
    %vm86 = vcmp.ge.s32.totalorder %v53, 1
    %vm87 = vcmp.ge.s32.totalorder %v54, 1
    %vm88 = vcmp.ge.s32.totalorder %v55, 1
    %v89 = vsel %vm85, 1, 0
    %v90 = vsel %vm86, 1, 0
    %v91 = vsel %vm87, 1, 0
    %v92 = vsel %vm88, 1, 0
    %vm93 = vcmp.eq.s32.totalorder %v89, 1
    %vm94 = vcmp.eq.s32.totalorder %v90, 1
    %vm95 = vcmp.eq.s32.totalorder %v91, 1
    %vm96 = vcmp.eq.s32.totalorder %v92, 1
    %v97 = vsel %vm93, %v84, -1e+30
    %v98 = vsel %vm94, %v83, -1e+30
    %v99 = vsel %vm95, %v82, -1e+30
    %v100 = vsel %vm96, %v81, -1e+30
    %v101 = vmax.f32 %v97, %v72
    %v102 = vmax.f32 %v98, %v73
    %v103 = vmax.f32 %v99, %v74
    %v104 = vmax.f32 %v100, %v75
    %v105 = vrot.slane %v72, 1
    %v106 = vrot.slane %v73, 1
    %v107 = vrot.slane %v74, 1
    %v108 = vrot.slane %v75, 1
    %vm109 = vcmp.lt.s32.totalorder %v41, 7
    %v110 = vsel %vm109, %v107, %v108
    %v111 = vsel %vm109, %v106, %v107
    %v112 = vsel %vm109, %v105, %v106
    %v113 = vsel %vm109, %v108, %v105
    %vm114 = vcmp.le.s32.totalorder %v52, 14
    %vm115 = vcmp.le.s32.totalorder %v53, 14
    %vm116 = vcmp.le.s32.totalorder %v54, 14
    %vm117 = vcmp.le.s32.totalorder %v55, 14
    %v118 = vsel %vm114, 1, 0
    %v119 = vsel %vm115, 1, 0
    %v120 = vsel %vm116, 1, 0
    %v121 = vsel %vm117, 1, 0
    %vm122 = vcmp.eq.s32.totalorder %v118, 1
    %vm123 = vcmp.eq.s32.totalorder %v119, 1
    %vm124 = vcmp.eq.s32.totalorder %v120, 1
    %vm125 = vcmp.eq.s32.totalorder %v121, 1
    %v126 = vsel %vm122, %v112, -1e+30
    %v127 = vsel %vm123, %v111, -1e+30
    %v128 = vsel %vm124, %v110, -1e+30
    %v129 = vsel %vm125, %v113, -1e+30
    %v130 = vmax.f32 %v101, %v126
    %v131 = vmax.f32 %v102, %v127
    %v132 = vmax.f32 %v103, %v128
    %v133 = vmax.f32 %v104, %v129
    %v134 = vpack.c.bf16 %v73, %v72
    %v135 = vpack.c.bf16 %v75, %v74
    %v136 = vld [vmem:[%s3] sm:$0x3]
    %vm137 = vcmask 31744
    %v139 = vsel %vm137, %v134, 0
    %v142 = vsel %vm137, %v135, 0
    %vm144 = vcmask 1041408
    %v146 = vsel %vm144, %v136, 0
    %148 = vmatpush.bf16.msra.mxu0 0
    %149 = vmatpush.bf16.msra.mxu0 0
    %150 = vmatpush.bf16.msra.mxu0 0
    %151 = vmatpush.bf16.msra.mxu0 0
    %152 = vmatpush.bf16.msra.mxu0 0
    %153 = vmatpush.bf16.msra.mxu0 0
    %154 = vmatpush.bf16.msra.mxu0 0
    %155 = vmatpush.bf16.msra.mxu0 %v146
    %156 = vmatmul.bf16.gmra.mxu0 %v139
    %v157 = vpop.f32.mrf.mxu0
    %v158 = vadd.f32 0.0, %v157
    %v159 = vpop.f32.mrf.mxu0
    %v160 = vadd.f32 0.0, %v159
    %161 = vmatmul.bf16.gmra.mxu0 %v142
    %v162 = vpop.f32.mrf.mxu0
    %v163 = vadd.f32 0.0, %v162
    %v164 = vpop.f32.mrf.mxu0
    %v165 = vadd.f32 0.0, %v164
    %166 = vdwg.mxu0
    %v167 = vrot.slane %v158, 5
    %v168 = vrot.slane %v160, 5
    %v169 = vrot.slane %v163, 5
    %v170 = vrot.slane %v165, 5
    %vm171 = vcmp.lt.s32.totalorder %v41, 3
    %v172 = vsel %vm171, %v169, %v170
    %v173 = vsel %vm171, %v168, %v169
    %v174 = vsel %vm171, %v167, %v168
    %v175 = vsel %vm171, %v170, %v167
    %vm176 = vcmp.ge.s32.totalorder %v52, 3
    %vm177 = vcmp.ge.s32.totalorder %v53, 3
    %vm178 = vcmp.ge.s32.totalorder %v54, 3
    %vm179 = vcmp.ge.s32.totalorder %v55, 3
    %v180 = vsel %vm176, 1, 0
    %v181 = vsel %vm177, 1, 0
    %v182 = vsel %vm178, 1, 0
    %v183 = vsel %vm179, 1, 0
    %vm184 = vcmp.eq.s32.totalorder %v180, 1
    %vm185 = vcmp.eq.s32.totalorder %v181, 1
    %vm186 = vcmp.eq.s32.totalorder %v182, 1
    %vm187 = vcmp.eq.s32.totalorder %v183, 1
    %v188 = vsel %vm184, %v175, 0.0
    %v189 = vsel %vm185, %v174, 0.0
    %v190 = vsel %vm186, %v173, 0.0
    %v191 = vsel %vm187, %v172, 0.0
    %v192 = vrot.slane %v158, 6
    %v193 = vrot.slane %v160, 6
    %v194 = vrot.slane %v163, 6
    %v195 = vrot.slane %v165, 6
    %vm196 = vcmp.lt.s32.totalorder %v41, 2
    %v197 = vsel %vm196, %v194, %v195
    %v198 = vsel %vm196, %v193, %v194
    %v199 = vsel %vm196, %v192, %v193
    %v200 = vsel %vm196, %v195, %v192
    %vm201 = vcmp.ge.s32.totalorder %v52, 2
    %vm202 = vcmp.ge.s32.totalorder %v53, 2
    %vm203 = vcmp.ge.s32.totalorder %v54, 2
    %vm204 = vcmp.ge.s32.totalorder %v55, 2
    %v205 = vsel %vm201, 1, 0
    %v206 = vsel %vm202, 1, 0
    %v207 = vsel %vm203, 1, 0
    %v208 = vsel %vm204, 1, 0
    %vm209 = vcmp.eq.s32.totalorder %v205, 1
    %vm210 = vcmp.eq.s32.totalorder %v206, 1
    %vm211 = vcmp.eq.s32.totalorder %v207, 1
    %vm212 = vcmp.eq.s32.totalorder %v208, 1
    %v213 = vsel %vm209, %v200, 0.0
    %v214 = vsel %vm210, %v199, 0.0
    %v215 = vsel %vm211, %v198, 0.0
    %v216 = vsel %vm212, %v197, 0.0
    %v217 = vrot.slane %v158, 7
    %v218 = vrot.slane %v160, 7
    %v219 = vrot.slane %v163, 7
    %v220 = vrot.slane %v165, 7
    %v221 = vsel %vm80, %v219, %v220
    %v222 = vsel %vm80, %v218, %v219
    %v223 = vsel %vm80, %v217, %v218
    %v224 = vsel %vm80, %v220, %v217
    %v225 = vsel %vm93, %v224, 0.0
    %v226 = vsel %vm94, %v223, 0.0
    %v227 = vsel %vm95, %v222, 0.0
    %v228 = vsel %vm96, %v221, 0.0
    %v229 = vrot.slane %v158, 1
    %v230 = vrot.slane %v160, 1
    %v231 = vrot.slane %v163, 1
    %v232 = vrot.slane %v165, 1
    %v233 = vsel %vm109, %v231, %v232
    %v234 = vsel %vm109, %v230, %v231
    %v235 = vsel %vm109, %v229, %v230
    %v236 = vsel %vm109, %v232, %v229
    %v237 = vsel %vm122, %v235, 0.0
    %v238 = vsel %vm123, %v234, 0.0
    %v239 = vsel %vm124, %v233, 0.0
    %v240 = vsel %vm125, %v236, 0.0
    %v241 = vrot.slane %v158, 2
    %v242 = vrot.slane %v160, 2
    %v243 = vrot.slane %v163, 2
    %v244 = vrot.slane %v165, 2
    %vm245 = vcmp.lt.s32.totalorder %v41, 6
    %v246 = vsel %vm245, %v243, %v244
    %v247 = vsel %vm245, %v242, %v243
    %v248 = vsel %vm245, %v241, %v242
    %v249 = vsel %vm245, %v244, %v241
    %vm250 = vcmp.le.s32.totalorder %v52, 13
    %vm251 = vcmp.le.s32.totalorder %v53, 13
    %vm252 = vcmp.le.s32.totalorder %v54, 13
    %vm253 = vcmp.le.s32.totalorder %v55, 13
    %v254 = vsel %vm250, 1, 0
    %v255 = vsel %vm251, 1, 0
    %v256 = vsel %vm252, 1, 0
    %v257 = vsel %vm253, 1, 0
    %vm258 = vcmp.eq.s32.totalorder %v254, 1
    %vm259 = vcmp.eq.s32.totalorder %v255, 1
    %vm260 = vcmp.eq.s32.totalorder %v256, 1
    %vm261 = vcmp.eq.s32.totalorder %v257, 1
    %v262 = vsel %vm258, %v248, 0.0
    %v263 = vsel %vm259, %v247, 0.0
    %v264 = vsel %vm260, %v246, 0.0
    %v265 = vsel %vm261, %v249, 0.0
    %v266 = vrot.slane %v158, 3
    %v267 = vrot.slane %v160, 3
    %v268 = vrot.slane %v163, 3
    %v269 = vrot.slane %v165, 3
    %vm270 = vcmp.lt.s32.totalorder %v41, 5
    %v271 = vsel %vm270, %v268, %v269
    %v272 = vsel %vm270, %v267, %v268
    %v273 = vsel %vm270, %v266, %v267
    %v274 = vsel %vm270, %v269, %v266
    %vm275 = vcmp.le.s32.totalorder %v52, 12
    %vm276 = vcmp.le.s32.totalorder %v53, 12
    %vm277 = vcmp.le.s32.totalorder %v54, 12
    %vm278 = vcmp.le.s32.totalorder %v55, 12
    %v279 = vsel %vm275, 1, 0
    %v280 = vsel %vm276, 1, 0
    %v281 = vsel %vm277, 1, 0
    %v282 = vsel %vm278, 1, 0
    %vm283 = vcmp.eq.s32.totalorder %v279, 1
    %vm284 = vcmp.eq.s32.totalorder %v280, 1
    %vm285 = vcmp.eq.s32.totalorder %v281, 1
    %vm286 = vcmp.eq.s32.totalorder %v282, 1
    %v287 = vsel %vm283, %v273, 0.0
    %v288 = vsel %vm284, %v272, 0.0
    %v289 = vsel %vm285, %v271, 0.0
    %v290 = vsel %vm286, %v274, 0.0
    %295 = vrot.lane.b32.xlu0 %v213, 16
    %v296 = vpop.permute.xlu0 %295
    %297 = vrot.lane.b32.xlu0 %v214, 16
    %v298 = vpop.permute.xlu0 %297
    %299 = vrot.lane.b32.xlu0 %v215, 16
    %v300 = vpop.permute.xlu0 %299
    %301 = vrot.lane.b32.xlu0 %v216, 16
    %v302 = vpop.permute.xlu0 %301
    %311 = vrot.lane.b32.xlu0 %v225, 32
    %v312 = vpop.permute.xlu0 %311
    %313 = vrot.lane.b32.xlu0 %v226, 32
    %v314 = vpop.permute.xlu0 %313
    %315 = vrot.lane.b32.xlu0 %v227, 32
    %v316 = vpop.permute.xlu0 %315
    %317 = vrot.lane.b32.xlu0 %v228, 32
    %v318 = vpop.permute.xlu0 %317
    %327 = vrot.lane.b32.xlu0 %v158, 48
    %v328 = vpop.permute.xlu0 %327
    %329 = vrot.lane.b32.xlu0 %v160, 48
    %v330 = vpop.permute.xlu0 %329
    %331 = vrot.lane.b32.xlu0 %v163, 48
    %v332 = vpop.permute.xlu0 %331
    %333 = vrot.lane.b32.xlu0 %v165, 48
    %v334 = vpop.permute.xlu0 %333
    %343 = vrot.lane.b32.xlu0 %v237, 64
    %v344 = vpop.permute.xlu0 %343
    %345 = vrot.lane.b32.xlu0 %v238, 64
    %v346 = vpop.permute.xlu0 %345
    %347 = vrot.lane.b32.xlu0 %v239, 64
    %v348 = vpop.permute.xlu0 %347
    %349 = vrot.lane.b32.xlu0 %v240, 64
    %v350 = vpop.permute.xlu0 %349
    %359 = vrot.lane.b32.xlu0 %v262, 80
    %v360 = vpop.permute.xlu0 %359
    %361 = vrot.lane.b32.xlu0 %v263, 80
    %v362 = vpop.permute.xlu0 %361
    %363 = vrot.lane.b32.xlu0 %v264, 80
    %v364 = vpop.permute.xlu0 %363
    %365 = vrot.lane.b32.xlu0 %v265, 80
    %v366 = vpop.permute.xlu0 %365
    %375 = vrot.lane.b32.xlu0 %v287, 96
    %v376 = vpop.permute.xlu0 %375
    %377 = vrot.lane.b32.xlu0 %v288, 96
    %v378 = vpop.permute.xlu0 %377
    %379 = vrot.lane.b32.xlu0 %v289, 96
    %v380 = vpop.permute.xlu0 %379
    %381 = vrot.lane.b32.xlu0 %v290, 96
    %v382 = vpop.permute.xlu0 %381
    %391 = vrot.lane.b32.xlu0 %v130, 112
    %v392 = vpop.permute.xlu0 %391
    %393 = vrot.lane.b32.xlu0 %v131, 112
    %v394 = vpop.permute.xlu0 %393
    %395 = vrot.lane.b32.xlu0 %v132, 112
    %v396 = vpop.permute.xlu0 %395
    %397 = vrot.lane.b32.xlu0 %v133, 112
    %v398 = vpop.permute.xlu0 %397
    %vm403 = vcmask 130048
    %v404 = vsel %vm403, %v188, %v296
    %v405 = vsel %vm403, %v189, %v298
    %v406 = vsel %vm403, %v190, %v300
    %v407 = vsel %vm403, %v191, %v302
    %vm408 = vcmask 261120
    %v409 = vsel %vm408, %v404, %v312
    %v410 = vsel %vm408, %v405, %v314
    %v411 = vsel %vm408, %v406, %v316
    %v412 = vsel %vm408, %v407, %v318
    %vm413 = vcmask 392192
    %v414 = vsel %vm413, %v409, %v328
    %v415 = vsel %vm413, %v410, %v330
    %v416 = vsel %vm413, %v411, %v332
    %v417 = vsel %vm413, %v412, %v334
    %vm418 = vcmask 523264
    %v419 = vsel %vm418, %v414, %v344
    %v420 = vsel %vm418, %v415, %v346
    %v421 = vsel %vm418, %v416, %v348
    %v422 = vsel %vm418, %v417, %v350
    %vm423 = vcmask 654336
    %v424 = vsel %vm423, %v419, %v360
    %v425 = vsel %vm423, %v420, %v362
    %v426 = vsel %vm423, %v421, %v364
    %v427 = vsel %vm423, %v422, %v366
    %vm428 = vcmask 785408
    %v429 = vsel %vm428, %v424, %v376
    %v430 = vsel %vm428, %v425, %v378
    %v431 = vsel %vm428, %v426, %v380
    %v432 = vsel %vm428, %v427, %v382
    %vm433 = vcmask 916480
    %v434 = vsel %vm433, %v429, %v392
    %v435 = vsel %vm433, %v430, %v394
    %v436 = vsel %vm433, %v431, %v396
    %v437 = vsel %vm433, %v432, %v398
    %vm438 = vcmask 949248
    %v439 = vsel %vm438, %v434, 0.0
    %v440 = vsel %vm438, %v435, 0.0
    %v441 = vsel %vm438, %v436, 0.0
    %v442 = vsel %vm438, %v437, 0.0
    %v443 = vpack.c.bf16 %v440, %v439
    %v444 = vpack.c.bf16 %v442, %v441
    %v445 = vld [vmem:[%s4] sm:$0xf]
    %v446 = vld [vmem:[%s4 + $0x4] sm:$0xf]
    %v447 = vld [vmem:[%s4 + $0x8] sm:$0xf]
    %v448 = vld [vmem:[%s4 + $0xc] sm:$0xf]
    %v449 = vld [vmem:[%s4 + $0x10] sm:$0xf]
    %v450 = vld [vmem:[%s4 + $0x14] sm:$0xf]
    %v451 = vld [vmem:[%s4 + $0x18] sm:$0xf]
    %v452 = vld [vmem:[%s4 + $0x1c] sm:$0xf]
    %v453 = vld [vmem:[%s4 + $0x20] sm:$0xf]
    %v454 = vld [vmem:[%s4 + $0x24] sm:$0xf]
    %v455 = vld [vmem:[%s4 + $0x28] sm:$0xf]
    %v456 = vld [vmem:[%s4 + $0x2c] sm:$0xf]
    %v457 = vld [vmem:[%s4 + $0x30] sm:$0xf]
    %v458 = vld [vmem:[%s4 + $0x34] sm:$0xf]
    %v459 = vld [vmem:[%s4 + $0x38] sm:$0xf]
    %v460 = vld [vmem:[%s4 + $0x3c] sm:$0xf]
    %v461 = vld [vmem:[%s5] sm:$0x1]
    %v463 = vperm.slane %v461, 0
    %v481 = vunpack.c.l.b16 %v445
    %v482 = vunpack.c.l.b16 %v446
    %v483 = vunpack.c.l.b16 %v447
    %v484 = vunpack.c.l.b16 %v448
    %v485 = vunpack.c.l.b16 %v449
    %v486 = vunpack.c.l.b16 %v450
    %v487 = vunpack.c.l.b16 %v451
    %v488 = vunpack.c.l.b16 %v452
    %v489 = vunpack.c.l.b16 %v453
    %v490 = vunpack.c.l.b16 %v454
    %v491 = vunpack.c.l.b16 %v455
    %v492 = vunpack.c.l.b16 %v456
    %v493 = vunpack.c.l.b16 %v457
    %v494 = vunpack.c.l.b16 %v458
    %v495 = vunpack.c.l.b16 %v459
    %v496 = vunpack.c.l.b16 %v460
    %v497 = vpack.c.b16 %v482, %v481
    %v498 = vpack.c.b16 %v484, %v483
    %v499 = vpack.c.b16 %v486, %v485
    %v500 = vpack.c.b16 %v488, %v487
    %v501 = vpack.c.b16 %v490, %v489
    %v502 = vpack.c.b16 %v492, %v491
    %v503 = vpack.c.b16 %v494, %v493
    %v504 = vpack.c.b16 %v496, %v495
    %513 = vmatpush.bf16.msra.mxu0 %v504
    %514 = vmatpush.bf16.msra.mxu0 %v503
    %515 = vmatpush.bf16.msra.mxu0 %v502
    %516 = vmatpush.bf16.msra.mxu0 %v501
    %517 = vmatpush.bf16.msra.mxu0 %v500
    %518 = vmatpush.bf16.msra.mxu0 %v499
    %519 = vmatpush.bf16.msra.mxu0 %v498
    %520 = vmatpush.bf16.msra.mxu0 %v497
    %521 = vmatmul.bf16.gmra.mxu0 %v443
    %v522 = vpop.f32.mrf.mxu0
    %v523 = vadd.f32 %v463, %v522
    %v524 = vpop.f32.mrf.mxu0
    %v525 = vadd.f32 %v463, %v524
    %526 = vmatmul.bf16.gmra.mxu0 %v444
    %v527 = vpop.f32.mrf.mxu0
    %v528 = vadd.f32 %v463, %v527
    %v529 = vpop.f32.mrf.mxu0
    %v530 = vadd.f32 %v463, %v529
    %531 = vdwg.mxu0
    %v532 = vmax.f32 %v523, 0.0
    %v533 = vmax.f32 %v525, 0.0
    %v534 = vmax.f32 %v528, 0.0
    %v535 = vmax.f32 %v530, 0.0
    %540 = vrot.lane.b32.xlu0 %v532, 96
    %v541 = vpop.permute.xlu0 %540
    %542 = vrot.lane.b32.xlu0 %v533, 96
    %v543 = vpop.permute.xlu0 %542
    %544 = vrot.lane.b32.xlu0 %v534, 96
    %v545 = vpop.permute.xlu0 %544
    %546 = vrot.lane.b32.xlu0 %v535, 96
    %v547 = vpop.permute.xlu0 %546
    %v552 = vadd.f32 %v532, %v541
    %v553 = vadd.f32 %v533, %v543
    %v554 = vadd.f32 %v534, %v545
    %v555 = vadd.f32 %v535, %v547
    %v556 = vrot.slane %v552, 1
    %v557 = vrot.slane %v553, 1
    %v558 = vrot.slane %v554, 1
    %v559 = vrot.slane %v555, 1
    %v560 = vsel %vm109, %v558, %v559
    %v561 = vsel %vm109, %v557, %v558
    %v562 = vsel %vm109, %v556, %v557
    %v563 = vsel %vm109, %v559, %v556
    %v564 = vmax.f32 %v552, %v562
    %v565 = vmax.f32 %v553, %v561
    %v566 = vmax.f32 %v554, %v560
    %v567 = vmax.f32 %v555, %v563
    %568 = vst.msk [vmem:[#allocation2] sm:$0xff] %vm408, %v564
    %569 = vst.msk [vmem:[#allocation2 + $0x8] sm:$0xff] %vm408, %v565
    %570 = vst.msk [vmem:[#allocation2 + $0x10] sm:$0xff] %vm408, %v566
    %571 = vst.msk [vmem:[#allocation2 + $0x18] sm:$0xff] %vm408, %v567
    %v572 = vld [vmem:[#allocation2] ss:$2 sm:$0xff]
    %s573 = scalar_lea.vmem [#allocation2], 16
    %v574 = vld [vmem:[%s573] ss:$2 sm:$0xff]
    %v575 = vpack.c.bf16 %v574, %v572
    %v576 = vld [vmem:[%s6] sm:$0xf]
    %v577 = vld [vmem:[%s6 + $0x4] sm:$0xf]
    %v578 = vld [vmem:[%s6 + $0x8] sm:$0xf]
    %v579 = vld [vmem:[%s6 + $0xc] sm:$0xf]
    %v580 = vld [vmem:[%s8] sm:$0x1]
    %v582 = vperm.slane %v580, 0
    %v588 = vunpack.c.l.b16 %v576
    %v589 = vunpack.c.l.b16 %v577
    %v590 = vunpack.c.l.b16 %v578
    %v591 = vunpack.c.l.b16 %v579
    %v592 = vpack.c.b16 %v589, %v588
    %v593 = vpack.c.b16 %v591, %v590
    %v597 = vsel %vm408, %v575, 0
    %599 = vmatpush.bf16.msra.mxu0 0
    %600 = vmatpush.bf16.msra.mxu0 0
    %601 = vmatpush.bf16.msra.mxu0 0
    %602 = vmatpush.bf16.msra.mxu0 0
    %603 = vmatpush.bf16.msra.mxu0 0
    %604 = vmatpush.bf16.msra.mxu0 0
    %605 = vmatpush.bf16.msra.mxu0 %v593
    %606 = vmatpush.bf16.msra.mxu0 %v592
    %607 = vmatmul.bf16.gmra.mxu0 %v597
    %v608 = vpop.f32.mrf.mxu0
    %v609 = vadd.f32 %v582, %v608
    %v610 = vpop.f32.mrf.mxu0
    %v611 = vadd.f32 %v582, %v610
    %612 = vdwg.mxu0
    %613 = vst [vmem:[#allocation3] sm:$0xff] %v609
    %614 = vst [vmem:[#allocation3 + $0x8] sm:$0xff] %v611
    %v615 = vld [vmem:[%s7] sm:$0xf]
    %v616 = vld [vmem:[%s7 + $0x4] sm:$0xf]
    %v617 = vld [vmem:[%s7 + $0x8] sm:$0xf]
    %v618 = vld [vmem:[%s7 + $0xc] sm:$0xf]
    %v619 = vld [vmem:[%s9] sm:$0xf]
    %v620 = vld [vmem:[%s9 + $0x4] sm:$0xf]
    %v621 = vld [vmem:[%s9 + $0x8] sm:$0xf]
    %v622 = vld [vmem:[%s9 + $0xc] sm:$0xf]
    %v623 = vld [vmem:[%s9 + $0x10] sm:$0xf]
    %v624 = vld [vmem:[%s9 + $0x14] sm:$0xf]
    %v625 = vld [vmem:[%s9 + $0x18] sm:$0xf]
    %v626 = vld [vmem:[%s9 + $0x1c] sm:$0xf]
    %v627 = vld [vmem:[%s10] sm:$0x1]
    %v628 = vld [vmem:[#allocation3] ss:$8 sm:$0x3]
    %v633 = vunpack.c.l.b16 %v615
    %v634 = vunpack.c.l.b16 %v616
    %v635 = vunpack.c.l.b16 %v617
    %v636 = vunpack.c.l.b16 %v618
    %v637 = vpack.c.b16 %v634, %v633
    %v638 = vpack.c.b16 %v636, %v635
    %v642 = vsel %vm408, 0, 0
    %644 = vmatpush.bf16.msra.mxu0 0
    %645 = vmatpush.bf16.msra.mxu0 0
    %646 = vmatpush.bf16.msra.mxu0 0
    %647 = vmatpush.bf16.msra.mxu0 0
    %648 = vmatpush.bf16.msra.mxu0 0
    %649 = vmatpush.bf16.msra.mxu0 0
    %650 = vmatpush.bf16.msra.mxu0 %v638
    %651 = vmatpush.bf16.msra.mxu0 %v637
    %652 = vmatmul.bf16.gmra.mxu0 %v642
    %v653 = vpop.f32.mrf.mxu0
    %v654 = vadd.f32 0.0, %v653
    %v655 = vpop.f32.mrf.mxu0
    %656 = vdwg.mxu0
    %v657 = vadd.f32 %v628, %v654
    %v658 = vxor.u32 %v657, 2147483648
    %v659 = vmul.f32 %v658, 1.442695
    %v660 = vpow.pop %v659
    %v661 = vadd.f32 %v660, 1.0
    %v662 = vrcp.pop %v661
    %v663 = vmul.f32 %v661, %v662
    %v664 = vsub.f32 1.0, %v663
    %v665 = vmul.f32 %v662, %v664
    %v666 = vadd.f32 %v662, %v665
    %vm667 = vweird.f32 %v661
    %vm668 = vweird.f32 %v662
    %vm669 = vmor %vm667, %vm668
    %v670 = vsel %vm669, %v662, %v666
    %v671 = vand.u32 2147483647, %v661
    %vm672 = vcmp.eq.f32.partialorder %v671, 8.507059e+37
    %v673 = vand.u32 %v661, 2147483648
    %v674 = vor.u32 1.1754944e-38, %v673
    %v675 = vsel %vm672, %v674, %v670
    %v676 = vmul.f32 1.0, %v675
    %v677 = vtanh.pop %v657
    %v678 = vmul.f32 %v676, 0.0
    %680 = vrot.lane.b32.xlu0 %v677, 64
    %v681 = vpop.permute.xlu0 %680
    %v683 = vmul.f32 %v676, %v681
    %685 = vrot.lane.b32.xlu0 %v683, 32
    %v686 = vpop.permute.xlu0 %685
    %v688 = vadd.f32 %v678, %v686
    %v689 = vtanh.pop %v688
    %691 = vrot.lane.b32.xlu0 %v689, 64
    %v692 = vpop.permute.xlu0 %691
    %v694 = vmul.f32 %v676, %v692
    %696 = vrot.lane.b32.xlu0 %v694, 32
    %v697 = vpop.permute.xlu0 %696
    %v699 = vsel %vm408, %v697, 0.0
    %v700 = vpack.c.bf16 %v699, %v699
    %v702 = vperm.slane %v627, 0
    %v712 = vunpack.c.l.b16 %v619
    %v713 = vunpack.c.l.b16 %v620
    %v714 = vunpack.c.l.b16 %v621
    %v715 = vunpack.c.l.b16 %v622
    %v716 = vunpack.c.l.b16 %v623
    %v717 = vunpack.c.l.b16 %v624
    %v718 = vunpack.c.l.b16 %v625
    %v719 = vunpack.c.l.b16 %v626
    %v720 = vpack.c.b16 %v713, %v712
    %v721 = vpack.c.b16 %v715, %v714
    %v722 = vpack.c.b16 %v717, %v716
    %v723 = vpack.c.b16 %v719, %v718
    %v729 = vsel %vm418, %v700, 0
    %731 = vmatpush.bf16.msra.mxu0 0
    %732 = vmatpush.bf16.msra.mxu0 0
    %733 = vmatpush.bf16.msra.mxu0 0
    %734 = vmatpush.bf16.msra.mxu0 0
    %735 = vmatpush.bf16.msra.mxu0 %v723
    %736 = vmatpush.bf16.msra.mxu0 %v722
    %737 = vmatpush.bf16.msra.mxu0 %v721
    %738 = vmatpush.bf16.msra.mxu0 %v720
    %739 = vmatmul.bf16.gmra.mxu0 %v729
    %v740 = vpop.f32.mrf.mxu0
    %v741 = vadd.f32 %v702, %v740
    %v742 = vpop.f32.mrf.mxu0
    %743 = vdwg.mxu0
    %v744 = vxor.u32 %v741, 2147483648
    %v745 = vmul.f32 %v744, 1.442695
    %v746 = vpow.pop %v745
    %v747 = vadd.f32 %v746, 1.0
    %v748 = vrcp.pop %v747
    %v749 = vmul.f32 %v747, %v748
    %v750 = vsub.f32 1.0, %v749
    %v751 = vmul.f32 %v748, %v750
    %v752 = vadd.f32 %v748, %v751
    %vm753 = vweird.f32 %v747
    %vm754 = vweird.f32 %v748
    %vm755 = vmor %vm753, %vm754
    %v756 = vsel %vm755, %v748, %v752
    %v757 = vand.u32 2147483647, %v747
    %vm758 = vcmp.eq.f32.partialorder %v757, 8.507059e+37
    %v759 = vand.u32 %v747, 2147483648
    %v760 = vor.u32 1.1754944e-38, %v759
    %v761 = vsel %vm758, %v760, %v756
    %v762 = vmul.f32 1.0, %v761
    %v763 = vtanh.pop %v741
    %v764 = vmul.f32 %v762, 0.0
    %766 = vrot.lane.b32.xlu0 %v763, 64
    %v767 = vpop.permute.xlu0 %766
    %v769 = vmul.f32 %v762, %v767
    %771 = vrot.lane.b32.xlu0 %v769, 32
    %v772 = vpop.permute.xlu0 %771
    %v774 = vadd.f32 %v764, %v772
    %v775 = vtanh.pop %v774
    %777 = vrot.lane.b32.xlu0 %v775, 64
    %v778 = vpop.permute.xlu0 %777
    %v780 = vmul.f32 %v762, %v778
    %s781 = scalar_lea.vmem [#allocation3], 1
    %v782 = vld [vmem:[%s781] ss:$8 sm:$0x3]
    %v783 = vpack.c.bf16 %v694, %v694
    %785 = vrot.lane.b32.xlu0 %v783, 32
    %v786 = vpop.permute.xlu0 %785
    %v788 = vsel %vm408, %v786, 0
    %790 = vmatpush.bf16.msra.mxu0 0
    %791 = vmatpush.bf16.msra.mxu0 0
    %792 = vmatpush.bf16.msra.mxu0 0
    %793 = vmatpush.bf16.msra.mxu0 0
    %794 = vmatpush.bf16.msra.mxu0 0
    %795 = vmatpush.bf16.msra.mxu0 0
    %796 = vmatpush.bf16.msra.mxu0 %v638
    %797 = vmatpush.bf16.msra.mxu0 %v637
    %798 = vmatmul.bf16.gmra.mxu0 %v788
    %v799 = vpop.f32.mrf.mxu0
    %v800 = vadd.f32 0.0, %v799
    %v801 = vpop.f32.mrf.mxu0
    %802 = vdwg.mxu0
    %v803 = vadd.f32 %v782, %v800
    %v804 = vxor.u32 %v803, 2147483648
    %v805 = vmul.f32 %v804, 1.442695
    %v806 = vpow.pop %v805
    %v807 = vadd.f32 %v806, 1.0
    %v808 = vrcp.pop %v807
    %v809 = vmul.f32 %v807, %v808
    %v810 = vsub.f32 1.0, %v809
    %v811 = vmul.f32 %v808, %v810
    %v812 = vadd.f32 %v808, %v811
    %vm813 = vweird.f32 %v807
    %vm814 = vweird.f32 %v808
    %vm815 = vmor %vm813, %vm814
    %v816 = vsel %vm815, %v808, %v812
    %v817 = vand.u32 2147483647, %v807
    %vm818 = vcmp.eq.f32.partialorder %v817, 8.507059e+37
    %v819 = vand.u32 %v807, 2147483648
    %v820 = vor.u32 1.1754944e-38, %v819
    %v821 = vsel %vm818, %v820, %v816
    %v822 = vmul.f32 1.0, %v821
    %v823 = vtanh.pop %v803
    %v824 = vmul.f32 %v822, %v688
    %826 = vrot.lane.b32.xlu0 %v823, 64
    %v827 = vpop.permute.xlu0 %826
    %v829 = vmul.f32 %v822, %v827
    %831 = vrot.lane.b32.xlu0 %v829, 32
    %v832 = vpop.permute.xlu0 %831
    %v834 = vadd.f32 %v824, %v832
    %v835 = vtanh.pop %v834
    %837 = vrot.lane.b32.xlu0 %v835, 64
    %v838 = vpop.permute.xlu0 %837
    %v840 = vmul.f32 %v822, %v838
    %842 = vrot.lane.b32.xlu0 %v840, 32
    %v843 = vpop.permute.xlu0 %842
    %846 = vrot.lane.b32.xlu0 %v780, 64
    %v847 = vpop.permute.xlu0 %846
    %v849 = vsel %vm408, %v843, %v847
    %v850 = vpack.c.bf16 %v849, %v849
    %v852 = vsel %vm418, %v850, 0
    %854 = vmatpush.bf16.msra.mxu0 0
    %855 = vmatpush.bf16.msra.mxu0 0
    %856 = vmatpush.bf16.msra.mxu0 0
    %857 = vmatpush.bf16.msra.mxu0 0
    %858 = vmatpush.bf16.msra.mxu0 %v723
    %859 = vmatpush.bf16.msra.mxu0 %v722
    %860 = vmatpush.bf16.msra.mxu0 %v721
    %861 = vmatpush.bf16.msra.mxu0 %v720
    %862 = vmatmul.bf16.gmra.mxu0 %v852
    %v863 = vpop.f32.mrf.mxu0
    %v864 = vadd.f32 %v702, %v863
    %v865 = vpop.f32.mrf.mxu0
    %866 = vdwg.mxu0
    %v867 = vxor.u32 %v864, 2147483648
    %v868 = vmul.f32 %v867, 1.442695
    %v869 = vpow.pop %v868
    %v870 = vadd.f32 %v869, 1.0
    %v871 = vrcp.pop %v870
    %v872 = vmul.f32 %v870, %v871
    %v873 = vsub.f32 1.0, %v872
    %v874 = vmul.f32 %v871, %v873
    %v875 = vadd.f32 %v871, %v874
    %vm876 = vweird.f32 %v870
    %vm877 = vweird.f32 %v871
    %vm878 = vmor %vm876, %vm877
    %v879 = vsel %vm878, %v871, %v875
    %v880 = vand.u32 2147483647, %v870
    %vm881 = vcmp.eq.f32.partialorder %v880, 8.507059e+37
    %v882 = vand.u32 %v870, 2147483648
    %v883 = vor.u32 1.1754944e-38, %v882
    %v884 = vsel %vm881, %v883, %v879
    %v885 = vmul.f32 1.0, %v884
    %v886 = vtanh.pop %v864
    %v887 = vmul.f32 %v885, %v774
    %889 = vrot.lane.b32.xlu0 %v886, 64
    %v890 = vpop.permute.xlu0 %889
    %v892 = vmul.f32 %v885, %v890
    %894 = vrot.lane.b32.xlu0 %v892, 32
    %v895 = vpop.permute.xlu0 %894
    %v897 = vadd.f32 %v887, %v895
    %v898 = vtanh.pop %v897
    %900 = vrot.lane.b32.xlu0 %v898, 64
    %v901 = vpop.permute.xlu0 %900
    %v903 = vmul.f32 %v885, %v901
    %s904 = scalar_lea.vmem [#allocation3], 2
    %v905 = vld [vmem:[%s904] ss:$8 sm:$0x3]
    %v906 = vpack.c.bf16 %v840, %v840
    %908 = vrot.lane.b32.xlu0 %v906, 32
    %v909 = vpop.permute.xlu0 %908
    %v911 = vsel %vm408, %v909, 0
    %913 = vmatpush.bf16.msra.mxu0 0
    %914 = vmatpush.bf16.msra.mxu0 0
    %915 = vmatpush.bf16.msra.mxu0 0
    %916 = vmatpush.bf16.msra.mxu0 0
    %917 = vmatpush.bf16.msra.mxu0 0
    %918 = vmatpush.bf16.msra.mxu0 0
    %919 = vmatpush.bf16.msra.mxu0 %v638
    %920 = vmatpush.bf16.msra.mxu0 %v637
    %921 = vmatmul.bf16.gmra.mxu0 %v911
    %v922 = vpop.f32.mrf.mxu0
    %v923 = vadd.f32 0.0, %v922
    %v924 = vpop.f32.mrf.mxu0
    %925 = vdwg.mxu0
    %v926 = vadd.f32 %v905, %v923
    %v927 = vxor.u32 %v926, 2147483648
    %v928 = vmul.f32 %v927, 1.442695
    %v929 = vpow.pop %v928
    %v930 = vadd.f32 %v929, 1.0
    %v931 = vrcp.pop %v930
    %v932 = vmul.f32 %v930, %v931
    %v933 = vsub.f32 1.0, %v932
    %v934 = vmul.f32 %v931, %v933
    %v935 = vadd.f32 %v931, %v934
    %vm936 = vweird.f32 %v930
    %vm937 = vweird.f32 %v931
    %vm938 = vmor %vm936, %vm937
    %v939 = vsel %vm938, %v931, %v935
    %v940 = vand.u32 2147483647, %v930
    %vm941 = vcmp.eq.f32.partialorder %v940, 8.507059e+37
    %v942 = vand.u32 %v930, 2147483648
    %v943 = vor.u32 1.1754944e-38, %v942
    %v944 = vsel %vm941, %v943, %v939
    %v945 = vmul.f32 1.0, %v944
    %v946 = vtanh.pop %v926
    %v947 = vmul.f32 %v945, %v834
    %949 = vrot.lane.b32.xlu0 %v946, 64
    %v950 = vpop.permute.xlu0 %949
    %v952 = vmul.f32 %v945, %v950
    %954 = vrot.lane.b32.xlu0 %v952, 32
    %v955 = vpop.permute.xlu0 %954
    %v957 = vadd.f32 %v947, %v955
    %v958 = vtanh.pop %v957
    %960 = vrot.lane.b32.xlu0 %v958, 64
    %v961 = vpop.permute.xlu0 %960
    %v963 = vmul.f32 %v945, %v961
    %965 = vrot.lane.b32.xlu0 %v963, 32
    %v966 = vpop.permute.xlu0 %965
    %969 = vrot.lane.b32.xlu0 %v903, 64
    %v970 = vpop.permute.xlu0 %969
    %v972 = vsel %vm408, %v966, %v970
    %v973 = vpack.c.bf16 %v972, %v972
    %v975 = vsel %vm418, %v973, 0
    %977 = vmatpush.bf16.msra.mxu0 0
    %978 = vmatpush.bf16.msra.mxu0 0
    %979 = vmatpush.bf16.msra.mxu0 0
    %980 = vmatpush.bf16.msra.mxu0 0
    %981 = vmatpush.bf16.msra.mxu0 %v723
    %982 = vmatpush.bf16.msra.mxu0 %v722
    %983 = vmatpush.bf16.msra.mxu0 %v721
    %984 = vmatpush.bf16.msra.mxu0 %v720
    %985 = vmatmul.bf16.gmra.mxu0 %v975
    %v986 = vpop.f32.mrf.mxu0
    %v987 = vadd.f32 %v702, %v986
    %v988 = vpop.f32.mrf.mxu0
    %989 = vdwg.mxu0
    %v990 = vxor.u32 %v987, 2147483648
    %v991 = vmul.f32 %v990, 1.442695
    %v992 = vpow.pop %v991
    %v993 = vadd.f32 %v992, 1.0
    %v994 = vrcp.pop %v993
    %v995 = vmul.f32 %v993, %v994
    %v996 = vsub.f32 1.0, %v995
    %v997 = vmul.f32 %v994, %v996
    %v998 = vadd.f32 %v994, %v997
    %vm999 = vweird.f32 %v993
    %vm1000 = vweird.f32 %v994
    %vm1001 = vmor %vm999, %vm1000
    %v1002 = vsel %vm1001, %v994, %v998
    %v1003 = vand.u32 2147483647, %v993
    %vm1004 = vcmp.eq.f32.partialorder %v1003, 8.507059e+37
    %v1005 = vand.u32 %v993, 2147483648
    %v1006 = vor.u32 1.1754944e-38, %v1005
    %v1007 = vsel %vm1004, %v1006, %v1002
    %v1008 = vmul.f32 1.0, %v1007
    %v1009 = vtanh.pop %v987
    %v1010 = vmul.f32 %v1008, %v897
    %1012 = vrot.lane.b32.xlu0 %v1009, 64
    %v1013 = vpop.permute.xlu0 %1012
    %v1015 = vmul.f32 %v1008, %v1013
    %1017 = vrot.lane.b32.xlu0 %v1015, 32
    %v1018 = vpop.permute.xlu0 %1017
    %v1020 = vadd.f32 %v1010, %v1018
    %v1021 = vtanh.pop %v1020
    %1023 = vrot.lane.b32.xlu0 %v1021, 64
    %v1024 = vpop.permute.xlu0 %1023
    %v1026 = vmul.f32 %v1008, %v1024
    %s1027 = scalar_lea.vmem [#allocation3], 3
    %v1028 = vld [vmem:[%s1027] ss:$8 sm:$0x3]
    %v1029 = vpack.c.bf16 %v963, %v963
    %1031 = vrot.lane.b32.xlu0 %v1029, 32
    %v1032 = vpop.permute.xlu0 %1031
    %v1034 = vsel %vm408, %v1032, 0
    %1036 = vmatpush.bf16.msra.mxu0 0
    %1037 = vmatpush.bf16.msra.mxu0 0
    %1038 = vmatpush.bf16.msra.mxu0 0
    %1039 = vmatpush.bf16.msra.mxu0 0
    %1040 = vmatpush.bf16.msra.mxu0 0
    %1041 = vmatpush.bf16.msra.mxu0 0
    %1042 = vmatpush.bf16.msra.mxu0 %v638
    %1043 = vmatpush.bf16.msra.mxu0 %v637
    %1044 = vmatmul.bf16.gmra.mxu0 %v1034
    %v1045 = vpop.f32.mrf.mxu0
    %v1046 = vadd.f32 0.0, %v1045
    %v1047 = vpop.f32.mrf.mxu0
    %1048 = vdwg.mxu0
    %v1049 = vadd.f32 %v1028, %v1046
    %v1050 = vxor.u32 %v1049, 2147483648
    %v1051 = vmul.f32 %v1050, 1.442695
    %v1052 = vpow.pop %v1051
    %v1053 = vadd.f32 %v1052, 1.0
    %v1054 = vrcp.pop %v1053
    %v1055 = vmul.f32 %v1053, %v1054
    %v1056 = vsub.f32 1.0, %v1055
    %v1057 = vmul.f32 %v1054, %v1056
    %v1058 = vadd.f32 %v1054, %v1057
    %vm1059 = vweird.f32 %v1053
    %vm1060 = vweird.f32 %v1054
    %vm1061 = vmor %vm1059, %vm1060
    %v1062 = vsel %vm1061, %v1054, %v1058
    %v1063 = vand.u32 2147483647, %v1053
    %vm1064 = vcmp.eq.f32.partialorder %v1063, 8.507059e+37
    %v1065 = vand.u32 %v1053, 2147483648
    %v1066 = vor.u32 1.1754944e-38, %v1065
    %v1067 = vsel %vm1064, %v1066, %v1062
    %v1068 = vmul.f32 1.0, %v1067
    %v1069 = vtanh.pop %v1049
    %v1070 = vmul.f32 %v1068, %v957
    %1072 = vrot.lane.b32.xlu0 %v1069, 64
    %v1073 = vpop.permute.xlu0 %1072
    %v1075 = vmul.f32 %v1068, %v1073
    %1077 = vrot.lane.b32.xlu0 %v1075, 32
    %v1078 = vpop.permute.xlu0 %1077
    %v1080 = vadd.f32 %v1070, %v1078
    %v1081 = vtanh.pop %v1080
    %1083 = vrot.lane.b32.xlu0 %v1081, 64
    %v1084 = vpop.permute.xlu0 %1083
    %v1086 = vmul.f32 %v1068, %v1084
    %1088 = vrot.lane.b32.xlu0 %v1086, 32
    %v1089 = vpop.permute.xlu0 %1088
    %1092 = vrot.lane.b32.xlu0 %v1026, 64
    %v1093 = vpop.permute.xlu0 %1092
    %v1095 = vsel %vm408, %v1089, %v1093
    %v1096 = vpack.c.bf16 %v1095, %v1095
    %v1098 = vsel %vm418, %v1096, 0
    %1100 = vmatpush.bf16.msra.mxu0 0
    %1101 = vmatpush.bf16.msra.mxu0 0
    %1102 = vmatpush.bf16.msra.mxu0 0
    %1103 = vmatpush.bf16.msra.mxu0 0
    %1104 = vmatpush.bf16.msra.mxu0 %v723
    %1105 = vmatpush.bf16.msra.mxu0 %v722
    %1106 = vmatpush.bf16.msra.mxu0 %v721
    %1107 = vmatpush.bf16.msra.mxu0 %v720
    %1108 = vmatmul.bf16.gmra.mxu0 %v1098
    %v1109 = vpop.f32.mrf.mxu0
    %v1110 = vadd.f32 %v702, %v1109
    %v1111 = vpop.f32.mrf.mxu0
    %1112 = vdwg.mxu0
    %v1113 = vxor.u32 %v1110, 2147483648
    %v1114 = vmul.f32 %v1113, 1.442695
    %v1115 = vpow.pop %v1114
    %v1116 = vadd.f32 %v1115, 1.0
    %v1117 = vrcp.pop %v1116
    %v1118 = vmul.f32 %v1116, %v1117
    %v1119 = vsub.f32 1.0, %v1118
    %v1120 = vmul.f32 %v1117, %v1119
    %v1121 = vadd.f32 %v1117, %v1120
    %vm1122 = vweird.f32 %v1116
    %vm1123 = vweird.f32 %v1117
    %vm1124 = vmor %vm1122, %vm1123
    %v1125 = vsel %vm1124, %v1117, %v1121
    %v1126 = vand.u32 2147483647, %v1116
    %vm1127 = vcmp.eq.f32.partialorder %v1126, 8.507059e+37
    %v1128 = vand.u32 %v1116, 2147483648
    %v1129 = vor.u32 1.1754944e-38, %v1128
    %v1130 = vsel %vm1127, %v1129, %v1125
    %v1131 = vmul.f32 1.0, %v1130
    %v1132 = vtanh.pop %v1110
    %v1133 = vmul.f32 %v1131, %v1020
    %1135 = vrot.lane.b32.xlu0 %v1132, 64
    %v1136 = vpop.permute.xlu0 %1135
    %v1138 = vmul.f32 %v1131, %v1136
    %1140 = vrot.lane.b32.xlu0 %v1138, 32
    %v1141 = vpop.permute.xlu0 %1140
    %v1143 = vadd.f32 %v1133, %v1141
    %v1144 = vtanh.pop %v1143
    %1146 = vrot.lane.b32.xlu0 %v1144, 64
    %v1147 = vpop.permute.xlu0 %1146
    %v1149 = vmul.f32 %v1131, %v1147
    %s1150 = scalar_lea.vmem [#allocation3], 4
    %v1151 = vld [vmem:[%s1150] ss:$8 sm:$0x3]
    %v1152 = vpack.c.bf16 %v1086, %v1086
    %1154 = vrot.lane.b32.xlu0 %v1152, 32
    %v1155 = vpop.permute.xlu0 %1154
    %v1157 = vsel %vm408, %v1155, 0
    %1159 = vmatpush.bf16.msra.mxu0 0
    %1160 = vmatpush.bf16.msra.mxu0 0
    %1161 = vmatpush.bf16.msra.mxu0 0
    %1162 = vmatpush.bf16.msra.mxu0 0
    %1163 = vmatpush.bf16.msra.mxu0 0
    %1164 = vmatpush.bf16.msra.mxu0 0
    %1165 = vmatpush.bf16.msra.mxu0 %v638
    %1166 = vmatpush.bf16.msra.mxu0 %v637
    %1167 = vmatmul.bf16.gmra.mxu0 %v1157
    %v1168 = vpop.f32.mrf.mxu0
    %v1169 = vadd.f32 0.0, %v1168
    %v1170 = vpop.f32.mrf.mxu0
    %1171 = vdwg.mxu0
    %v1172 = vadd.f32 %v1151, %v1169
    %v1173 = vxor.u32 %v1172, 2147483648
    %v1174 = vmul.f32 %v1173, 1.442695
    %v1175 = vpow.pop %v1174
    %v1176 = vadd.f32 %v1175, 1.0
    %v1177 = vrcp.pop %v1176
    %v1178 = vmul.f32 %v1176, %v1177
    %v1179 = vsub.f32 1.0, %v1178
    %v1180 = vmul.f32 %v1177, %v1179
    %v1181 = vadd.f32 %v1177, %v1180
    %vm1182 = vweird.f32 %v1176
    %vm1183 = vweird.f32 %v1177
    %vm1184 = vmor %vm1182, %vm1183
    %v1185 = vsel %vm1184, %v1177, %v1181
    %v1186 = vand.u32 2147483647, %v1176
    %vm1187 = vcmp.eq.f32.partialorder %v1186, 8.507059e+37
    %v1188 = vand.u32 %v1176, 2147483648
    %v1189 = vor.u32 1.1754944e-38, %v1188
    %v1190 = vsel %vm1187, %v1189, %v1185
    %v1191 = vmul.f32 1.0, %v1190
    %v1192 = vtanh.pop %v1172
    %v1193 = vmul.f32 %v1191, %v1080
    %1195 = vrot.lane.b32.xlu0 %v1192, 64
    %v1196 = vpop.permute.xlu0 %1195
    %v1198 = vmul.f32 %v1191, %v1196
    %1200 = vrot.lane.b32.xlu0 %v1198, 32
    %v1201 = vpop.permute.xlu0 %1200
    %v1203 = vadd.f32 %v1193, %v1201
    %v1204 = vtanh.pop %v1203
    %1206 = vrot.lane.b32.xlu0 %v1204, 64
    %v1207 = vpop.permute.xlu0 %1206
    %v1209 = vmul.f32 %v1191, %v1207
    %1211 = vrot.lane.b32.xlu0 %v1209, 32
    %v1212 = vpop.permute.xlu0 %1211
    %1215 = vrot.lane.b32.xlu0 %v1149, 64
    %v1216 = vpop.permute.xlu0 %1215
    %v1218 = vsel %vm408, %v1212, %v1216
    %v1219 = vpack.c.bf16 %v1218, %v1218
    %v1221 = vsel %vm418, %v1219, 0
    %1223 = vmatpush.bf16.msra.mxu0 0
    %1224 = vmatpush.bf16.msra.mxu0 0
    %1225 = vmatpush.bf16.msra.mxu0 0
    %1226 = vmatpush.bf16.msra.mxu0 0
    %1227 = vmatpush.bf16.msra.mxu0 %v723
    %1228 = vmatpush.bf16.msra.mxu0 %v722
    %1229 = vmatpush.bf16.msra.mxu0 %v721
    %1230 = vmatpush.bf16.msra.mxu0 %v720
    %1231 = vmatmul.bf16.gmra.mxu0 %v1221
    %v1232 = vpop.f32.mrf.mxu0
    %v1233 = vadd.f32 %v702, %v1232
    %v1234 = vpop.f32.mrf.mxu0
    %1235 = vdwg.mxu0
    %v1236 = vxor.u32 %v1233, 2147483648
    %v1237 = vmul.f32 %v1236, 1.442695
    %v1238 = vpow.pop %v1237
    %v1239 = vadd.f32 %v1238, 1.0
    %v1240 = vrcp.pop %v1239
    %v1241 = vmul.f32 %v1239, %v1240
    %v1242 = vsub.f32 1.0, %v1241
    %v1243 = vmul.f32 %v1240, %v1242
    %v1244 = vadd.f32 %v1240, %v1243
    %vm1245 = vweird.f32 %v1239
    %vm1246 = vweird.f32 %v1240
    %vm1247 = vmor %vm1245, %vm1246
    %v1248 = vsel %vm1247, %v1240, %v1244
    %v1249 = vand.u32 2147483647, %v1239
    %vm1250 = vcmp.eq.f32.partialorder %v1249, 8.507059e+37
    %v1251 = vand.u32 %v1239, 2147483648
    %v1252 = vor.u32 1.1754944e-38, %v1251
    %v1253 = vsel %vm1250, %v1252, %v1248
    %v1254 = vmul.f32 1.0, %v1253
    %v1255 = vtanh.pop %v1233
    %v1256 = vmul.f32 %v1254, %v1143
    %1258 = vrot.lane.b32.xlu0 %v1255, 64
    %v1259 = vpop.permute.xlu0 %1258
    %v1261 = vmul.f32 %v1254, %v1259
    %1263 = vrot.lane.b32.xlu0 %v1261, 32
    %v1264 = vpop.permute.xlu0 %1263
    %v1266 = vadd.f32 %v1256, %v1264
    %v1267 = vtanh.pop %v1266
    %1269 = vrot.lane.b32.xlu0 %v1267, 64
    %v1270 = vpop.permute.xlu0 %1269
    %v1272 = vmul.f32 %v1254, %v1270
    %s1273 = scalar_lea.vmem [#allocation3], 5
    %v1274 = vld [vmem:[%s1273] ss:$8 sm:$0x3]
    %v1275 = vpack.c.bf16 %v1209, %v1209
    %1277 = vrot.lane.b32.xlu0 %v1275, 32
    %v1278 = vpop.permute.xlu0 %1277
    %v1280 = vsel %vm408, %v1278, 0
    %1282 = vmatpush.bf16.msra.mxu0 0
    %1283 = vmatpush.bf16.msra.mxu0 0
    %1284 = vmatpush.bf16.msra.mxu0 0
    %1285 = vmatpush.bf16.msra.mxu0 0
    %1286 = vmatpush.bf16.msra.mxu0 0
    %1287 = vmatpush.bf16.msra.mxu0 0
    %1288 = vmatpush.bf16.msra.mxu0 %v638
    %1289 = vmatpush.bf16.msra.mxu0 %v637
    %1290 = vmatmul.bf16.gmra.mxu0 %v1280
    %v1291 = vpop.f32.mrf.mxu0
    %v1292 = vadd.f32 0.0, %v1291
    %v1293 = vpop.f32.mrf.mxu0
    %1294 = vdwg.mxu0
    %v1295 = vadd.f32 %v1274, %v1292
    %v1296 = vxor.u32 %v1295, 2147483648
    %v1297 = vmul.f32 %v1296, 1.442695
    %v1298 = vpow.pop %v1297
    %v1299 = vadd.f32 %v1298, 1.0
    %v1300 = vrcp.pop %v1299
    %v1301 = vmul.f32 %v1299, %v1300
    %v1302 = vsub.f32 1.0, %v1301
    %v1303 = vmul.f32 %v1300, %v1302
    %v1304 = vadd.f32 %v1300, %v1303
    %vm1305 = vweird.f32 %v1299
    %vm1306 = vweird.f32 %v1300
    %vm1307 = vmor %vm1305, %vm1306
    %v1308 = vsel %vm1307, %v1300, %v1304
    %v1309 = vand.u32 2147483647, %v1299
    %vm1310 = vcmp.eq.f32.partialorder %v1309, 8.507059e+37
    %v1311 = vand.u32 %v1299, 2147483648
    %v1312 = vor.u32 1.1754944e-38, %v1311
    %v1313 = vsel %vm1310, %v1312, %v1308
    %v1314 = vmul.f32 1.0, %v1313
    %v1315 = vtanh.pop %v1295
    %v1316 = vmul.f32 %v1314, %v1203
    %1318 = vrot.lane.b32.xlu0 %v1315, 64
    %v1319 = vpop.permute.xlu0 %1318
    %v1321 = vmul.f32 %v1314, %v1319
    %1323 = vrot.lane.b32.xlu0 %v1321, 32
    %v1324 = vpop.permute.xlu0 %1323
    %v1326 = vadd.f32 %v1316, %v1324
    %v1327 = vtanh.pop %v1326
    %1329 = vrot.lane.b32.xlu0 %v1327, 64
    %v1330 = vpop.permute.xlu0 %1329
    %v1332 = vmul.f32 %v1314, %v1330
    %1334 = vrot.lane.b32.xlu0 %v1332, 32
    %v1335 = vpop.permute.xlu0 %1334
    %1338 = vrot.lane.b32.xlu0 %v1272, 64
    %v1339 = vpop.permute.xlu0 %1338
    %v1341 = vsel %vm408, %v1335, %v1339
    %v1342 = vpack.c.bf16 %v1341, %v1341
    %v1344 = vsel %vm418, %v1342, 0
    %1346 = vmatpush.bf16.msra.mxu0 0
    %1347 = vmatpush.bf16.msra.mxu0 0
    %1348 = vmatpush.bf16.msra.mxu0 0
    %1349 = vmatpush.bf16.msra.mxu0 0
    %1350 = vmatpush.bf16.msra.mxu0 %v723
    %1351 = vmatpush.bf16.msra.mxu0 %v722
    %1352 = vmatpush.bf16.msra.mxu0 %v721
    %1353 = vmatpush.bf16.msra.mxu0 %v720
    %1354 = vmatmul.bf16.gmra.mxu0 %v1344
    %v1355 = vpop.f32.mrf.mxu0
    %v1356 = vadd.f32 %v702, %v1355
    %v1357 = vpop.f32.mrf.mxu0
    %1358 = vdwg.mxu0
    %v1359 = vxor.u32 %v1356, 2147483648
    %v1360 = vmul.f32 %v1359, 1.442695
    %v1361 = vpow.pop %v1360
    %v1362 = vadd.f32 %v1361, 1.0
    %v1363 = vrcp.pop %v1362
    %v1364 = vmul.f32 %v1362, %v1363
    %v1365 = vsub.f32 1.0, %v1364
    %v1366 = vmul.f32 %v1363, %v1365
    %v1367 = vadd.f32 %v1363, %v1366
    %vm1368 = vweird.f32 %v1362
    %vm1369 = vweird.f32 %v1363
    %vm1370 = vmor %vm1368, %vm1369
    %v1371 = vsel %vm1370, %v1363, %v1367
    %v1372 = vand.u32 2147483647, %v1362
    %vm1373 = vcmp.eq.f32.partialorder %v1372, 8.507059e+37
    %v1374 = vand.u32 %v1362, 2147483648
    %v1375 = vor.u32 1.1754944e-38, %v1374
    %v1376 = vsel %vm1373, %v1375, %v1371
    %v1377 = vmul.f32 1.0, %v1376
    %v1378 = vtanh.pop %v1356
    %v1379 = vmul.f32 %v1377, %v1266
    %1381 = vrot.lane.b32.xlu0 %v1378, 64
    %v1382 = vpop.permute.xlu0 %1381
    %v1384 = vmul.f32 %v1377, %v1382
    %1386 = vrot.lane.b32.xlu0 %v1384, 32
    %v1387 = vpop.permute.xlu0 %1386
    %v1389 = vadd.f32 %v1379, %v1387
    %v1390 = vtanh.pop %v1389
    %1392 = vrot.lane.b32.xlu0 %v1390, 64
    %v1393 = vpop.permute.xlu0 %1392
    %v1395 = vmul.f32 %v1377, %v1393
    %s1396 = scalar_lea.vmem [#allocation3], 6
    %v1397 = vld [vmem:[%s1396] ss:$8 sm:$0x3]
    %v1398 = vpack.c.bf16 %v1332, %v1332
    %1400 = vrot.lane.b32.xlu0 %v1398, 32
    %v1401 = vpop.permute.xlu0 %1400
    %v1403 = vsel %vm408, %v1401, 0
    %1405 = vmatpush.bf16.msra.mxu0 0
    %1406 = vmatpush.bf16.msra.mxu0 0
    %1407 = vmatpush.bf16.msra.mxu0 0
    %1408 = vmatpush.bf16.msra.mxu0 0
    %1409 = vmatpush.bf16.msra.mxu0 0
    %1410 = vmatpush.bf16.msra.mxu0 0
    %1411 = vmatpush.bf16.msra.mxu0 %v638
    %1412 = vmatpush.bf16.msra.mxu0 %v637
    %1413 = vmatmul.bf16.gmra.mxu0 %v1403
    %v1414 = vpop.f32.mrf.mxu0
    %v1415 = vadd.f32 0.0, %v1414
    %v1416 = vpop.f32.mrf.mxu0
    %1417 = vdwg.mxu0
    %v1418 = vadd.f32 %v1397, %v1415
    %v1419 = vxor.u32 %v1418, 2147483648
    %v1420 = vmul.f32 %v1419, 1.442695
    %v1421 = vpow.pop %v1420
    %v1422 = vadd.f32 %v1421, 1.0
    %v1423 = vrcp.pop %v1422
    %v1424 = vmul.f32 %v1422, %v1423
    %v1425 = vsub.f32 1.0, %v1424
    %v1426 = vmul.f32 %v1423, %v1425
    %v1427 = vadd.f32 %v1423, %v1426
    %vm1428 = vweird.f32 %v1422
    %vm1429 = vweird.f32 %v1423
    %vm1430 = vmor %vm1428, %vm1429
    %v1431 = vsel %vm1430, %v1423, %v1427
    %v1432 = vand.u32 2147483647, %v1422
    %vm1433 = vcmp.eq.f32.partialorder %v1432, 8.507059e+37
    %v1434 = vand.u32 %v1422, 2147483648
    %v1435 = vor.u32 1.1754944e-38, %v1434
    %v1436 = vsel %vm1433, %v1435, %v1431
    %v1437 = vmul.f32 1.0, %v1436
    %v1438 = vtanh.pop %v1418
    %v1439 = vmul.f32 %v1437, %v1326
    %1441 = vrot.lane.b32.xlu0 %v1438, 64
    %v1442 = vpop.permute.xlu0 %1441
    %v1444 = vmul.f32 %v1437, %v1442
    %1446 = vrot.lane.b32.xlu0 %v1444, 32
    %v1447 = vpop.permute.xlu0 %1446
    %v1449 = vadd.f32 %v1439, %v1447
    %v1450 = vtanh.pop %v1449
    %1452 = vrot.lane.b32.xlu0 %v1450, 64
    %v1453 = vpop.permute.xlu0 %1452
    %v1455 = vmul.f32 %v1437, %v1453
    %1457 = vrot.lane.b32.xlu0 %v1455, 32
    %v1458 = vpop.permute.xlu0 %1457
    %1461 = vrot.lane.b32.xlu0 %v1395, 64
    %v1462 = vpop.permute.xlu0 %1461
    %v1464 = vsel %vm408, %v1458, %v1462
    %v1465 = vpack.c.bf16 %v1464, %v1464
    %v1467 = vsel %vm418, %v1465, 0
    %1469 = vmatpush.bf16.msra.mxu0 0
    %1470 = vmatpush.bf16.msra.mxu0 0
    %1471 = vmatpush.bf16.msra.mxu0 0
    %1472 = vmatpush.bf16.msra.mxu0 0
    %1473 = vmatpush.bf16.msra.mxu0 %v723
    %1474 = vmatpush.bf16.msra.mxu0 %v722
    %1475 = vmatpush.bf16.msra.mxu0 %v721
    %1476 = vmatpush.bf16.msra.mxu0 %v720
    %1477 = vmatmul.bf16.gmra.mxu0 %v1467
    %v1478 = vpop.f32.mrf.mxu0
    %v1479 = vadd.f32 %v702, %v1478
    %v1480 = vpop.f32.mrf.mxu0
    %1481 = vdwg.mxu0
    %v1482 = vxor.u32 %v1479, 2147483648
    %v1483 = vmul.f32 %v1482, 1.442695
    %v1484 = vpow.pop %v1483
    %v1485 = vadd.f32 %v1484, 1.0
    %v1486 = vrcp.pop %v1485
    %v1487 = vmul.f32 %v1485, %v1486
    %v1488 = vsub.f32 1.0, %v1487
    %v1489 = vmul.f32 %v1486, %v1488
    %v1490 = vadd.f32 %v1486, %v1489
    %vm1491 = vweird.f32 %v1485
    %vm1492 = vweird.f32 %v1486
    %vm1493 = vmor %vm1491, %vm1492
    %v1494 = vsel %vm1493, %v1486, %v1490
    %v1495 = vand.u32 2147483647, %v1485
    %vm1496 = vcmp.eq.f32.partialorder %v1495, 8.507059e+37
    %v1497 = vand.u32 %v1485, 2147483648
    %v1498 = vor.u32 1.1754944e-38, %v1497
    %v1499 = vsel %vm1496, %v1498, %v1494
    %v1500 = vmul.f32 1.0, %v1499
    %v1501 = vtanh.pop %v1479
    %v1502 = vmul.f32 %v1500, %v1389
    %1504 = vrot.lane.b32.xlu0 %v1501, 64
    %v1505 = vpop.permute.xlu0 %1504
    %v1507 = vmul.f32 %v1500, %v1505
    %1509 = vrot.lane.b32.xlu0 %v1507, 32
    %v1510 = vpop.permute.xlu0 %1509
    %v1512 = vadd.f32 %v1502, %v1510
    %v1513 = vtanh.pop %v1512
    %1515 = vrot.lane.b32.xlu0 %v1513, 64
    %v1516 = vpop.permute.xlu0 %1515
    %v1518 = vmul.f32 %v1500, %v1516
    %s1519 = scalar_lea.vmem [#allocation3], 7
    %v1520 = vld [vmem:[%s1519] ss:$8 sm:$0x3]
    %v1521 = vpack.c.bf16 %v1455, %v1455
    %1523 = vrot.lane.b32.xlu0 %v1521, 32
    %v1524 = vpop.permute.xlu0 %1523
    %v1526 = vsel %vm408, %v1524, 0
    %1528 = vmatpush.bf16.msra.mxu0 0
    %1529 = vmatpush.bf16.msra.mxu0 0
    %1530 = vmatpush.bf16.msra.mxu0 0
    %1531 = vmatpush.bf16.msra.mxu0 0
    %1532 = vmatpush.bf16.msra.mxu0 0
    %1533 = vmatpush.bf16.msra.mxu0 0
    %1534 = vmatpush.bf16.msra.mxu0 %v638
    %1535 = vmatpush.bf16.msra.mxu0 %v637
    %1536 = vmatmul.bf16.gmra.mxu0 %v1526
    %v1537 = vpop.f32.mrf.mxu0
    %v1538 = vadd.f32 0.0, %v1537
    %v1539 = vpop.f32.mrf.mxu0
    %1540 = vdwg.mxu0
    %v1541 = vadd.f32 %v1520, %v1538
    %v1542 = vxor.u32 %v1541, 2147483648
    %v1543 = vmul.f32 %v1542, 1.442695
    %v1544 = vpow.pop %v1543
    %v1545 = vadd.f32 %v1544, 1.0
    %v1546 = vrcp.pop %v1545
    %v1547 = vmul.f32 %v1545, %v1546
    %v1548 = vsub.f32 1.0, %v1547
    %v1549 = vmul.f32 %v1546, %v1548
    %v1550 = vadd.f32 %v1546, %v1549
    %vm1551 = vweird.f32 %v1545
    %vm1552 = vweird.f32 %v1546
    %vm1553 = vmor %vm1551, %vm1552
    %v1554 = vsel %vm1553, %v1546, %v1550
    %v1555 = vand.u32 2147483647, %v1545
    %vm1556 = vcmp.eq.f32.partialorder %v1555, 8.507059e+37
    %v1557 = vand.u32 %v1545, 2147483648
    %v1558 = vor.u32 1.1754944e-38, %v1557
    %v1559 = vsel %vm1556, %v1558, %v1554
    %v1560 = vmul.f32 1.0, %v1559
    %v1561 = vtanh.pop %v1541
    %v1562 = vmul.f32 %v1560, %v1449
    %1564 = vrot.lane.b32.xlu0 %v1561, 64
    %v1565 = vpop.permute.xlu0 %1564
    %v1567 = vmul.f32 %v1560, %v1565
    %1569 = vrot.lane.b32.xlu0 %v1567, 32
    %v1570 = vpop.permute.xlu0 %1569
    %v1572 = vadd.f32 %v1562, %v1570
    %v1573 = vtanh.pop %v1572
    %1575 = vrot.lane.b32.xlu0 %v1573, 64
    %v1576 = vpop.permute.xlu0 %1575
    %v1578 = vmul.f32 %v1560, %v1576
    %1580 = vrot.lane.b32.xlu0 %v1578, 32
    %v1581 = vpop.permute.xlu0 %1580
    %1584 = vrot.lane.b32.xlu0 %v1518, 64
    %v1585 = vpop.permute.xlu0 %1584
    %v1587 = vsel %vm408, %v1581, %v1585
    %v1588 = vpack.c.bf16 %v1587, %v1587
    %v1590 = vsel %vm418, %v1588, 0
    %1592 = vmatpush.bf16.msra.mxu0 0
    %1593 = vmatpush.bf16.msra.mxu0 0
    %1594 = vmatpush.bf16.msra.mxu0 0
    %1595 = vmatpush.bf16.msra.mxu0 0
    %1596 = vmatpush.bf16.msra.mxu0 %v723
    %1597 = vmatpush.bf16.msra.mxu0 %v722
    %1598 = vmatpush.bf16.msra.mxu0 %v721
    %1599 = vmatpush.bf16.msra.mxu0 %v720
    %1600 = vmatmul.bf16.gmra.mxu0 %v1590
    %v1601 = vpop.f32.mrf.mxu0
    %v1602 = vadd.f32 %v702, %v1601
    %v1603 = vpop.f32.mrf.mxu0
    %1604 = vdwg.mxu0
    %v1605 = vxor.u32 %v1602, 2147483648
    %v1606 = vmul.f32 %v1605, 1.442695
    %v1607 = vpow.pop %v1606
    %v1608 = vadd.f32 %v1607, 1.0
    %v1609 = vrcp.pop %v1608
    %v1610 = vmul.f32 %v1608, %v1609
    %v1611 = vsub.f32 1.0, %v1610
    %v1612 = vmul.f32 %v1609, %v1611
    %v1613 = vadd.f32 %v1609, %v1612
    %vm1614 = vweird.f32 %v1608
    %vm1615 = vweird.f32 %v1609
    %vm1616 = vmor %vm1614, %vm1615
    %v1617 = vsel %vm1616, %v1609, %v1613
    %v1618 = vand.u32 2147483647, %v1608
    %vm1619 = vcmp.eq.f32.partialorder %v1618, 8.507059e+37
    %v1620 = vand.u32 %v1608, 2147483648
    %v1621 = vor.u32 1.1754944e-38, %v1620
    %v1622 = vsel %vm1619, %v1621, %v1617
    %v1623 = vmul.f32 1.0, %v1622
    %v1624 = vtanh.pop %v1602
    %v1625 = vmul.f32 %v1623, %v1512
    %1627 = vrot.lane.b32.xlu0 %v1624, 64
    %v1628 = vpop.permute.xlu0 %1627
    %v1630 = vmul.f32 %v1623, %v1628
    %1632 = vrot.lane.b32.xlu0 %v1630, 32
    %v1633 = vpop.permute.xlu0 %1632
    %v1635 = vadd.f32 %v1625, %v1633
    %v1636 = vtanh.pop %v1635
    %1638 = vrot.lane.b32.xlu0 %v1636, 64
    %v1639 = vpop.permute.xlu0 %1638
    %v1641 = vmul.f32 %v1623, %v1639
    %1643 = vrot.lane.b32.xlu0 %v1641, 32
    %v1644 = vpop.permute.xlu0 %1643
    %vm1646 = vcmask 254976
    %1647 = vst.msk [vmem:[#allocation4] sm:$0x3] %vm1646, %v1644
    // Predicated region
    $region46: #{tpu_custom_call.1} parent=1 // pred_check
      _
    $region47: #{tpu_custom_call.1} parent=1 // pred_check_branch
      %1649 = sbr.rel (0) target = $region49
    $region48: #{tpu_custom_call.1} parent=1 // pred_region
      %1651 = vsyncadd [#allocation5], 0
      %s1653 = sshll.u32 [#allocation4], 4
      %s1654 = int_to_ptr.vmem [resolvable:$true] %s1653
      %s1655 = sshll.u32 %s11, 4
      %s1656 = int_to_ptr.hbm [resolvable:$true] %s1655
      %1658 = dma.vmem_to_hbm [thread:$0]  %s1654, 32, %s1656, [#allocation5]
    $region49: #{tpu_custom_call.1} parent=1 // pred_fallthru
      _
    // Predicated region
    $region50: #{tpu_custom_call.1} parent=1 // pred_check
      _
    $region51: #{tpu_custom_call.1} parent=1 // pred_check_branch
      %1660 = sbr.rel (0) target = $region53
    $region52: #{tpu_custom_call.1} parent=1 // pred_region
      %1662 = dma.done [#allocation5], 32
    $region53: #{tpu_custom_call.1} parent=1 // pred_fallthru
      _
    %1663 = vsyncpa [#allocation5], 1

</llo_original>
